<compile_context>
chip_gen: v6e
topology: v6e:2x2x1
jax: 0.10.0
libtpu: 0.0.40
codegen_flags: <defaults>
</compile_context>

<pallas_src>
import jax
import jax.numpy as jnp
from jax.experimental import pallas as pl
from jax.experimental.pallas import tpu as pltpu

BN_EPS = 1e-5  # nn.BatchNorm2d default eps


# --------------------------------------------------------------------------
# Fused attention-gate kernel
# --------------------------------------------------------------------------
def _attention_kernel(g_ref, x_ref, wg_ref, bg_ref, wx_ref, bx_ref,
                      wpsi_ref, bpsi_ref, o_ref):
    TH, W, F_l = x_ref.shape[1], x_ref.shape[2], x_ref.shape[3]
    F_g = g_ref.shape[3]
    M = TH * W

    g = g_ref[0].reshape(M, F_g)
    x = x_ref[0].reshape(M, F_l)          # kept in f32 for the final gating mul

    # g1 + x1 : two MXU matmuls (split-K over the two inputs), f32 accumulate.
    s = jnp.dot(g.astype(jnp.bfloat16), wg_ref[...],
                preferred_element_type=jnp.float32) + bg_ref[...]
    s = s + jnp.dot(x.astype(jnp.bfloat16), wx_ref[...],
                    preferred_element_type=jnp.float32) + bx_ref[...]

    # ReLU (f32 on the VPU).
    s = jnp.maximum(s, 0.0)

    # psi projection (F_int -> 1): VPU multiply + lane reduction instead of a
    # degenerate 1-lane MXU matmul.
    logit = jnp.sum(s * wpsi_ref[...], axis=-1, keepdims=True) + bpsi_ref[...]
    psi = 1.0 / (1.0 + jnp.exp(-logit))    # sigmoid, exp on the EUP

    # Gate x and store lane-dense (F_l last).
    o_ref[0] = (x * psi).reshape(TH, W, F_l)


def _pick_tile_h(H, W, f_g, f_l, budget_bytes=2 << 20):
    """Largest divisor of H whose double-buffered tile fits a small VMEM budget."""
    bytes_per_row = W * (f_g + 2 * f_l) * 4 * 2   # g + x + out, double-buffered
    th = max(1, min(H, budget_bytes // max(bytes_per_row, 1)))
    while H % th:
        th -= 1
    return int(th)


def attention_block_forward(kparams, g_nchw, x_nchw):
    """g, x: NCHW float32.  Returns NCHW float32 (matches the PyTorch module)."""
    g = jnp.transpose(g_nchw, (0, 2, 3, 1)).astype(jnp.float32)  # NCHW -> NHWC
    x = jnp.transpose(x_nchw, (0, 2, 3, 1)).astype(jnp.float32)
    N, H, W, F_l = x.shape
    F_g = g.shape[3]
    F_int = kparams["wg"].shape[1]

    TH = _pick_tile_h(H, W, F_g, F_l)
    grid = (N, H // TH)

    out = pl.pallas_call(
        _attention_kernel,
        out_shape=jax.ShapeDtypeStruct((N, H, W, F_l), jnp.float32),
        grid=grid,
        in_specs=[
            pl.BlockSpec((1, TH, W, F_g), lambda n, h: (n, h, 0, 0)),
            pl.BlockSpec((1, TH, W, F_l), lambda n, h: (n, h, 0, 0)),
            pl.BlockSpec((F_g, F_int), lambda n, h: (0, 0)),
            pl.BlockSpec((1, F_int), lambda n, h: (0, 0)),
            pl.BlockSpec((F_l, F_int), lambda n, h: (0, 0)),
            pl.BlockSpec((1, F_int), lambda n, h: (0, 0)),
            pl.BlockSpec((1, F_int), lambda n, h: (0, 0)),
            pl.BlockSpec((1, 1), lambda n, h: (0, 0)),
        ],
        out_specs=pl.BlockSpec((1, TH, W, F_l), lambda n, h: (n, h, 0, 0)),
        compiler_params=pltpu.CompilerParams(
            dimension_semantics=("parallel", "parallel"),
            vmem_limit_bytes=32 * 1024 * 1024,
        ),
    )(g, x, kparams["wg"], kparams["bg"], kparams["wx"], kparams["bx"],
      kparams["wpsi"], kparams["bpsi"])

    return jnp.transpose(out, (0, 3, 1, 2))  # NHWC -> NCHW


# --------------------------------------------------------------------------
# Parameters: torch-layout conv + BatchNorm params, folded once (eval mode)
# into matmul-layout weights/biases, weights pre-cast to bf16.
# --------------------------------------------------------------------------
def init_raw_params(key, f_g, f_l, f_int):
    ks = jax.random.split(key, 9)

    def conv(kw, kb, cout, cin):
        w = jax.random.normal(kw, (cout, cin, 1, 1), jnp.float32) * 0.1
        b = jax.random.normal(kb, (cout,), jnp.float32) * 0.05
        return w, b

    def bn(k, c):
        k1, k2, k3, k4 = jax.random.split(k, 4)
        gamma = 1.0 + 0.1 * jax.random.normal(k1, (c,), jnp.float32)
        beta = 0.1 * jax.random.normal(k2, (c,), jnp.float32)
        mean = 0.05 * jax.random.normal(k3, (c,), jnp.float32)
        var = 1.0 + 0.2 * jax.random.uniform(k4, (c,), jnp.float32)
        return gamma, beta, mean, var

    return {
        "W_g": conv(ks[0], ks[1], f_int, f_g) + bn(ks[2], f_int),
        "W_x": conv(ks[3], ks[4], f_int, f_l) + bn(ks[5], f_int),
        "psi": conv(ks[6], ks[7], 1, f_int) + bn(ks[8], 1),
    }


def _fold_bn(w, b, gamma, beta, mean, var):
    # BatchNorm in eval mode (running stats) folded into the 1x1 conv.
    # w: (Cout, Cin, 1, 1) torch layout -> (Cin, Cout) matmul layout.
    scale = gamma / jnp.sqrt(var + BN_EPS)
    w2 = w[:, :, 0, 0] * scale[:, None]
    b2 = (b - mean) * scale + beta
    return jnp.transpose(w2, (1, 0)), b2


def prepare_params(raw):
    wg, bg = _fold_bn(*raw["W_g"])
    wx, bx = _fold_bn(*raw["W_x"])
    wpsi, bpsi = _fold_bn(*raw["psi"])      # (F_int, 1), (1,)
    return {
        "wg": wg.astype(jnp.bfloat16),
        "bg": bg.reshape(1, -1),
        "wx": wx.astype(jnp.bfloat16),
        "bx": bx.reshape(1, -1),
        "wpsi": jnp.transpose(wpsi, (1, 0)),  # (1, F_int), f32 (VPU contraction)
        "bpsi": bpsi.reshape(1, 1),
    }


# --------------------------------------------------------------------------
# Pure-JAX reference (mirrors the PyTorch module in eval mode)
# --------------------------------------------------------------------------
def reference_forward(raw, g, x):
    def conv_bn(inp, w, b, gamma, beta, mean, var):
        y = jnp.einsum("nchw,oc->nohw", inp, w[:, :, 0, 0]) \
            + b[None, :, None, None]
        scale = gamma / jnp.sqrt(var + BN_EPS)
        return (y - mean[None, :, None, None]) * scale[None, :, None, None] \
            + beta[None, :, None, None]

    g1 = conv_bn(g, *raw["W_g"])
    x1 = conv_bn(x, *raw["W_x"])
    s = jnp.maximum(g1 + x1, 0.0)
    psi = jax.nn.sigmoid(conv_bn(s, *raw["psi"]))
    return x * psi


if __name__ == "__main__":
    # TODO(synk): BatchNorm2d is implemented in eval mode (running statistics
    # folded into the convs); training-mode batch statistics are not computed.
    N, F_G, F_L, F_INT, H, W = 2, 32, 32, 16, 16, 16

    key = jax.random.PRNGKey(0)
    k_p, k_g, k_x = jax.random.split(key, 3)
    raw = init_raw_params(k_p, F_G, F_L, F_INT)
    kparams = prepare_params(raw)
    g = jax.random.normal(k_g, (N, F_G, H, W), jnp.float32)
    x = jax.random.normal(k_x, (N, F_L, H, W), jnp.float32)

    fwd = jax.jit(attention_block_forward)
    out = jax.block_until_ready(fwd(kparams, g, x))

    assert out.shape == (N, F_L, H, W), out.shape
    assert bool(jnp.all(jnp.isfinite(out)))

    ref = reference_forward(raw, g, x)
    max_err = float(jnp.max(jnp.abs(out - ref)))
    assert max_err < 5e-2, f"max |err| = {max_err}"

    print("KERNEL_OK")
</pallas_src>

<mosaic_0001>
module attributes {stable_mosaic.version = 11 : i64} {
  func.func @_attention_kernel(%arg0: i32, %arg1: i32, %arg2: memref<1x16x16x32xf32, #tpu.memory_space<vmem>>, %arg3: memref<1x16x16x32xf32, #tpu.memory_space<vmem>>, %arg4: memref<32x16xbf16, #tpu.memory_space<vmem>>, %arg5: memref<1x16xf32, #tpu.memory_space<vmem>>, %arg6: memref<32x16xbf16, #tpu.memory_space<vmem>>, %arg7: memref<1x16xf32, #tpu.memory_space<vmem>>, %arg8: memref<1x16xf32, #tpu.memory_space<vmem>>, %arg9: memref<1x1xf32, #tpu.memory_space<vmem>>, %arg10: memref<1x16x16x32xf32, #tpu.memory_space<vmem>>) attributes {dimension_semantics = [#tpu.dimension_semantics<parallel>, #tpu.dimension_semantics<parallel>], iteration_bounds = array<i64: 2, 1>, scalar_prefetch = 0 : i64, scratch_operands = 0 : i64, tpu.core_type = #tpu.core_type<tc>, window_params = [{transform_indices = @transform_0, window_bounds = array<i64: 1, 16, 16, 32>}, {transform_indices = @transform_1, window_bounds = array<i64: 1, 16, 16, 32>}, {pipeline_mode = #tpu.pipeline_mode<synchronous>, transform_indices = @transform_2, window_bounds = array<i64: 32, 16>}, {pipeline_mode = #tpu.pipeline_mode<synchronous>, transform_indices = @transform_3, window_bounds = array<i64: 1, 16>}, {pipeline_mode = #tpu.pipeline_mode<synchronous>, transform_indices = @transform_4, window_bounds = array<i64: 32, 16>}, {pipeline_mode = #tpu.pipeline_mode<synchronous>, transform_indices = @transform_5, window_bounds = array<i64: 1, 16>}, {pipeline_mode = #tpu.pipeline_mode<synchronous>, transform_indices = @transform_6, window_bounds = array<i64: 1, 16>}, {pipeline_mode = #tpu.pipeline_mode<synchronous>, transform_indices = @transform_7, window_bounds = array<i64: 1, 1>}, {transform_indices = @transform_8, window_bounds = array<i64: 1, 16, 16, 32>}]} {
    %c0 = arith.constant 0 : index
    %c0_0 = arith.constant 0 : index
    %c0_1 = arith.constant 0 : index
    %c0_2 = arith.constant 0 : index
    %0 = vector.load %arg2[%c0, %c0_0, %c0_1, %c0_2] : memref<1x16x16x32xf32, #tpu.memory_space<vmem>>, vector<1x16x16x32xf32>
    %1 = vector.shape_cast %0 : vector<1x16x16x32xf32> to vector<16x16x32xf32>
    %2 = vector.shape_cast %1 : vector<16x16x32xf32> to vector<256x32xf32>
    %c0_3 = arith.constant 0 : index
    %c0_4 = arith.constant 0 : index
    %c0_5 = arith.constant 0 : index
    %c0_6 = arith.constant 0 : index
    %3 = vector.load %arg3[%c0_3, %c0_4, %c0_5, %c0_6] : memref<1x16x16x32xf32, #tpu.memory_space<vmem>>, vector<1x16x16x32xf32>
    %4 = vector.shape_cast %3 : vector<1x16x16x32xf32> to vector<16x16x32xf32>
    %5 = vector.shape_cast %4 : vector<16x16x32xf32> to vector<256x32xf32>
    %6 = arith.truncf %2 : vector<256x32xf32> to vector<256x32xbf16>
    %c0_7 = arith.constant 0 : index
    %c0_8 = arith.constant 0 : index
    %7 = vector.load %arg4[%c0_7, %c0_8] : memref<32x16xbf16, #tpu.memory_space<vmem>>, vector<32x16xbf16>
    %cst = arith.constant dense<0.000000e+00> : vector<256x16xf32>
    %8 = tpu.matmul %6, %7, %cst {dimension_numbers = #tpu.dot_dimension_numbers<[1], [0], [0], [1], [0, 0, 1, 1], [], []>} : vector<256x32xbf16>, vector<32x16xbf16>, vector<256x16xf32> -> vector<256x16xf32>
    %c0_9 = arith.constant 0 : index
    %c0_10 = arith.constant 0 : index
    %9 = vector.load %arg5[%c0_9, %c0_10] : memref<1x16xf32, #tpu.memory_space<vmem>>, vector<1x16xf32>
    %10 = vector.broadcast %9 : vector<1x16xf32> to vector<256x16xf32>
    %11 = arith.addf %8, %10 : vector<256x16xf32>
    %12 = arith.truncf %5 : vector<256x32xf32> to vector<256x32xbf16>
    %c0_11 = arith.constant 0 : index
    %c0_12 = arith.constant 0 : index
    %13 = vector.load %arg6[%c0_11, %c0_12] : memref<32x16xbf16, #tpu.memory_space<vmem>>, vector<32x16xbf16>
    %cst_13 = arith.constant dense<0.000000e+00> : vector<256x16xf32>
    %14 = tpu.matmul %12, %13, %cst_13 {dimension_numbers = #tpu.dot_dimension_numbers<[1], [0], [0], [1], [0, 0, 1, 1], [], []>} : vector<256x32xbf16>, vector<32x16xbf16>, vector<256x16xf32> -> vector<256x16xf32>
    %15 = arith.addf %11, %14 : vector<256x16xf32>
    %c0_14 = arith.constant 0 : index
    %c0_15 = arith.constant 0 : index
    %16 = vector.load %arg7[%c0_14, %c0_15] : memref<1x16xf32, #tpu.memory_space<vmem>>, vector<1x16xf32>
    %17 = vector.broadcast %16 : vector<1x16xf32> to vector<256x16xf32>
    %18 = arith.addf %15, %17 : vector<256x16xf32>
    %cst_16 = arith.constant 0.000000e+00 : f32
    %19 = vector.broadcast %cst_16 : f32 to vector<256x16xf32>
    %20 = arith.maximumf %18, %19 : vector<256x16xf32>
    %c0_17 = arith.constant 0 : index
    %c0_18 = arith.constant 0 : index
    %21 = vector.load %arg8[%c0_17, %c0_18] : memref<1x16xf32, #tpu.memory_space<vmem>>, vector<1x16xf32>
    %22 = vector.broadcast %21 : vector<1x16xf32> to vector<256x16xf32>
    %23 = arith.mulf %20, %22 : vector<256x16xf32>
    %cst_19 = arith.constant dense<0.000000e+00> : vector<256xf32>
    %24 = vector.multi_reduction <add>, %23, %cst_19 [1] : vector<256x16xf32> to vector<256xf32>
    %25 = vector.shape_cast %24 : vector<256xf32> to vector<256x1xf32>
    %c0_20 = arith.constant 0 : index
    %c0_21 = arith.constant 0 : index
    %26 = vector.load %arg9[%c0_20, %c0_21] : memref<1x1xf32, #tpu.memory_space<vmem>>, vector<1x1xf32>
    %27 = vector.broadcast %26 : vector<1x1xf32> to vector<256x1xf32>
    %28 = arith.addf %25, %27 : vector<256x1xf32>
    %cst_22 = arith.constant 0.000000e+00 : f32
    %29 = vector.broadcast %cst_22 : f32 to vector<256x1xf32>
    %30 = arith.subf %29, %28 : vector<256x1xf32>
    %31 = math.exp %30 : vector<256x1xf32>
    %cst_23 = arith.constant 1.000000e+00 : f32
    %32 = vector.broadcast %cst_23 : f32 to vector<256x1xf32>
    %33 = arith.addf %32, %31 : vector<256x1xf32>
    %cst_24 = arith.constant 1.000000e+00 : f32
    %34 = vector.broadcast %cst_24 : f32 to vector<256x1xf32>
    %35 = arith.divf %34, %33 : vector<256x1xf32>
    %36 = vector.broadcast %35 : vector<256x1xf32> to vector<256x32xf32>
    %37 = arith.mulf %5, %36 : vector<256x32xf32>
    %38 = vector.shape_cast %37 : vector<256x32xf32> to vector<16x16x32xf32>
    %c0_25 = arith.constant 0 : index
    %c0_26 = arith.constant 0 : index
    %c0_27 = arith.constant 0 : index
    %c0_28 = arith.constant 0 : index
    %39 = vector.load %arg10[%c0_25, %c0_26, %c0_27, %c0_28] : memref<1x16x16x32xf32, #tpu.memory_space<vmem>>, vector<1x16x16x32xf32>
    %40 = vector.shape_cast %39 : vector<1x16x16x32xf32> to vector<16x16x32xf32>
    %41 = vector.shape_cast %38 : vector<16x16x32xf32> to vector<1x16x16x32xf32>
    tpu.vector_store %arg10[%c0_25, %c0_26, %c0_27, %c0_28], %41 {strides = array<i32>} : memref<1x16x16x32xf32, #tpu.memory_space<vmem>>, vector<1x16x16x32xf32>,
    return
  }
  func.func @transform_0(%arg0: i32, %arg1: i32) -> (i32, i32, i32, i32) {
    %c0_i32 = arith.constant 0 : i32
    %c0_i32_0 = arith.constant 0 : i32
    %c0_i32_1 = arith.constant 0 : i32
    return %arg0, %arg1, %c0_i32, %c0_i32_0 : i32, i32, i32, i32
  }
  func.func @transform_1(%arg0: i32, %arg1: i32) -> (i32, i32, i32, i32) {
    %c0_i32 = arith.constant 0 : i32
    %c0_i32_0 = arith.constant 0 : i32
    %c0_i32_1 = arith.constant 0 : i32
    return %arg0, %arg1, %c0_i32, %c0_i32_0 : i32, i32, i32, i32
  }
  func.func @transform_2(%arg0: i32, %arg1: i32) -> (i32, i32) {
    %c0_i32 = arith.constant 0 : i32
    %c0_i32_0 = arith.constant 0 : i32
    %c0_i32_1 = arith.constant 0 : i32
    return %c0_i32, %c0_i32_0 : i32, i32
  }
  func.func @transform_3(%arg0: i32, %arg1: i32) -> (i32, i32) {
    %c0_i32 = arith.constant 0 : i32
    %c0_i32_0 = arith.constant 0 : i32
    %c0_i32_1 = arith.constant 0 : i32
    return %c0_i32, %c0_i32_0 : i32, i32
  }
  func.func @transform_4(%arg0: i32, %arg1: i32) -> (i32, i32) {
    %c0_i32 = arith.constant 0 : i32
    %c0_i32_0 = arith.constant 0 : i32
    %c0_i32_1 = arith.constant 0 : i32
    return %c0_i32, %c0_i32_0 : i32, i32
  }
  func.func @transform_5(%arg0: i32, %arg1: i32) -> (i32, i32) {
    %c0_i32 = arith.constant 0 : i32
    %c0_i32_0 = arith.constant 0 : i32
    %c0_i32_1 = arith.constant 0 : i32
    return %c0_i32, %c0_i32_0 : i32, i32
  }
  func.func @transform_6(%arg0: i32, %arg1: i32) -> (i32, i32) {
    %c0_i32 = arith.constant 0 : i32
    %c0_i32_0 = arith.constant 0 : i32
    %c0_i32_1 = arith.constant 0 : i32
    return %c0_i32, %c0_i32_0 : i32, i32
  }
  func.func @transform_7(%arg0: i32, %arg1: i32) -> (i32, i32) {
    %c0_i32 = arith.constant 0 : i32
    %c0_i32_0 = arith.constant 0 : i32
    %c0_i32_1 = arith.constant 0 : i32
    return %c0_i32, %c0_i32_0 : i32, i32
  }
  func.func @transform_8(%arg0: i32, %arg1: i32) -> (i32, i32, i32, i32) {
    %c0_i32 = arith.constant 0 : i32
    %c0_i32_0 = arith.constant 0 : i32
    %c0_i32_1 = arith.constant 0 : i32
    return %arg0, %arg1, %c0_i32, %c0_i32_0 : i32, i32, i32, i32
  }
}

</mosaic_0001>

<llo_original>
// kernel: attention_block_forward.1
$region0: #{attention_block_forward.1}
  #allocation0 [shape = 'u32[]', space=smem, size = 0x4, offset = 0x4, fixed_abs, tag = 'smem constant byte address 0x4 - core index']
  #allocation1 [shape = 'u32[144,128]{1,0:T(1,128)}', space=vmem, size = 0x12000, scoped, tag = 'internal scratch']
  #allocation2 [shape = 'f32[1,1]{1,0:T(1,128)S(1)}', space=vmem, size = 0x200, scoped, tag = 'scoped memory for attention_block_forward.1']
  %s0 = inlined_call_operand.hbm [shape: f32[2,16,16,32], index: 0, kind: input, shape index: {}]
  %s1 = inlined_call_operand.hbm [shape: f32[2,16,16,32], index: 1, kind: input, shape index: {}]
  %s2 = inlined_call_operand.vmem [shape: bf16[32,16], index: 2, kind: input, shape index: {}]
  %s3 = inlined_call_operand.vmem [shape: f32[1,16], index: 3, kind: input, shape index: {}]
  %s4 = inlined_call_operand.vmem [shape: bf16[32,16], index: 4, kind: input, shape index: {}]
  %s5 = inlined_call_operand.vmem [shape: f32[1,16], index: 5, kind: input, shape index: {}]
  %s6 = inlined_call_operand.vmem [shape: f32[1,16], index: 6, kind: input, shape index: {}]
  %s7 = inlined_call_operand.<no memory space> [shape: f32[1,1], index: 7, kind: input, shape index: {}]
  %s8 = inlined_call_operand.hbm [shape: f32[2,16,16,32], index: 8, kind: output, shape index: {}]
  %s9 = sld [smem:[#allocation0]]
  $region73: #{attention_block_forward.1} parent=0
    _
  %s11 = ssub.s32 1, %s9
  %s12 = scalar_select 0, %s11, %s9
  %v13 = vstv %s7
  %14 = vst [vmem:[#allocation2] sm:$0x1] %v13
  $region1: #{attention_block_forward.1} parent=0
    #allocation3 [shape = 'u8[262144]{0}', space=vmem, size = 0x40000, scoped, tag = 'input window, operand 0']
    #allocation4 [shape = 's32[2]{0}', space=sflag, size = 0x8, scoped, tag = 'scoped memory for attention_block_forward.1']
    #allocation5 [shape = 's32[2]{0}', space=sflag, size = 0x8, scoped, tag = 'scoped memory for attention_block_forward.1']
    #allocation6 [shape = 'u8[262144]{0}', space=vmem, size = 0x40000, scoped, tag = 'input window, operand 1']
    #allocation7 [shape = 's32[2]{0}', space=sflag, size = 0x8, scoped, tag = 'scoped memory for attention_block_forward.1']
    #allocation8 [shape = 'u8[262144]{0}', space=vmem, size = 0x40000, scoped, tag = 'output window, operand 0']
    %15 = vsyncpa [#allocation4], 0
    %s16 = scalar_lea.sflag [#allocation4], 1
    %17 = vsyncpa %s16, 0
    %18 = vsyncpa [#allocation7], 0
    %s19 = scalar_lea.sflag [#allocation7], 1
    %20 = vsyncpa %s19, 0
    %21 = vsyncpa [#allocation5], 0
    %s22 = scalar_lea.sflag [#allocation5], 1
    %23 = vsyncpa %s22, 0
    loop: start=0, step=1, limit=4
    $region2: #{attention_block_forward.1} parent=1 // loop_pre_header
      _
    $region3: #{attention_block_forward.1} parent=1 // loop_header
      %s25 = sphi 0, %s29
      %p26 = scmp.ge.s32.totalorder %s25, 4
      %s32 = sphi 0, %s44
      %s33 = sphi 0, %s40
      %s34 = sphi 0, %s32
      %s35 = sphi 0, %s33
      %s36 = sphi 0, %s34
      %s37 = sphi 0, %s35
      %s49 = sphi 0, %s51
      %s52 = sphi 0, %s49
      %s53 = sphi 0, %s52
      %s69 = sphi 0, %s53
      %s77 = sphi 0, %s79
      %s80 = sphi 0, %s77
      %s81 = sphi 0, %s80
      %s97 = sphi 0, %s81
      %s101 = sphi 0, %s101
      %s103 = sphi 0, %s101
      %s104 = sphi 0, %s103
      %s118 = sphi 0, %s104
      %s122 = sphi 0, %s122
      %s124 = sphi 0, %s122
      %s125 = sphi 0, %s124
      %s139 = sphi 0, %s125
      %s143 = sphi 0, %s143
      %s145 = sphi 0, %s143
      %s146 = sphi 0, %s145
      %s160 = sphi 0, %s146
      %s164 = sphi 0, %s164
      %s166 = sphi 0, %s164
      %s167 = sphi 0, %s166
      %s181 = sphi 0, %s167
      %s185 = sphi 0, %s185
      %s187 = sphi 0, %s185
      %s188 = sphi 0, %s187
      %s202 = sphi 0, %s188
      %s206 = sphi 0, %s206
      %s208 = sphi 0, %s206
      %s209 = sphi 0, %s208
      %s223 = sphi 0, %s209
      %s231 = sphi 0, %s233
      %s234 = sphi 0, %s231
      %s235 = sphi 0, %s234
      %s251 = sphi 0, %s235
    $region4: #{attention_block_forward.1} parent=1 // loop_header_branch
      %28 = sbr.rel (%p26) target = $region8
    $region5: #{attention_block_forward.1} parent=1 // loop_body
      %s30 = ssub.s32 %s25, 1
      %s31 = ssub.s32 %s25, 2
      %s38 = sadd.s32 1, %s33
      %p39 = scmp.ge.s32.totalorder %s38, 1
      %s40 = scalar_select %p39, 0, %s38
      %s41 = sadd.s32 1, %s32
      %s42 = scalar_select %p39, %s41, %s32
      %p43 = scmp.ge.s32.totalorder %s42, 2
      %s44 = scalar_select %p43, 0, %s42
      %s45 = ssub.s32 %s32, %s44
      %s46 = ssub.s32 %s33, %s40
      %s47 = sor.u32 %s45, %s46
      %p48 = scmp.eq.s32.totalorder %s47, 0
      %s50 = sadd.s32 %s49, 1
      %s51 = scalar_select %p48, %s49, %s50
      %p54 = pneg %p48
      %p55 = scmp.eq.s32.totalorder %s25, 1
      %p56 = por %p54, %p55
      %p57 = scmp.ne.s32.totalorder %s49, %s52
      %p58 = scmp.eq.s32.totalorder %s25, 0
      %p59 = por %p57, %p58
      %p60 = scmp.ne.s32.totalorder %s49, %s52
      %p61 = scmp.eq.s32.totalorder %s30, 1
      %p62 = por %p60, %p61
      %p63 = scmp.ne.s32.totalorder %s52, %s53
      %p64 = scmp.eq.s32.totalorder %s30, 0
      %p65 = por %p63, %p64
      %p66 = scmp.ne.s32.totalorder %s52, %s53
      %p67 = scmp.eq.s32.totalorder %s31, 1
      %p68 = por %p66, %p67
      %p70 = scmp.ne.s32.totalorder %s53, %s69
      %p71 = scmp.eq.s32.totalorder %s31, 0
      %p72 = por %p70, %p71
      %s73 = ssub.s32 %s32, %s44
      %s74 = ssub.s32 %s33, %s40
      %s75 = sor.u32 %s73, %s74
      %p76 = scmp.eq.s32.totalorder %s75, 0
      %s78 = sadd.s32 %s77, 1
      %s79 = scalar_select %p76, %s77, %s78
      %p82 = pneg %p76
      %p83 = scmp.eq.s32.totalorder %s25, 1
      %p84 = por %p82, %p83
      %p85 = scmp.ne.s32.totalorder %s77, %s80
      %p86 = scmp.eq.s32.totalorder %s25, 0
      %p87 = por %p85, %p86
      %p88 = scmp.ne.s32.totalorder %s77, %s80
      %p89 = scmp.eq.s32.totalorder %s30, 1
      %p90 = por %p88, %p89
      %p91 = scmp.ne.s32.totalorder %s80, %s81
      %p92 = scmp.eq.s32.totalorder %s30, 0
      %p93 = por %p91, %p92
      %p94 = scmp.ne.s32.totalorder %s80, %s81
      %p95 = scmp.eq.s32.totalorder %s31, 1
      %p96 = por %p94, %p95
      %p98 = scmp.ne.s32.totalorder %s81, %s97
      %p99 = scmp.eq.s32.totalorder %s31, 0
      %p100 = por %p98, %p99
      %s102 = sadd.s32 %s101, 1
      %p105 = scmp.eq.s32.totalorder %s25, 1
      %p106 = scmp.ne.s32.totalorder %s101, %s103
      %p107 = scmp.eq.s32.totalorder %s25, 0
      %p108 = por %p106, %p107
      %p109 = scmp.ne.s32.totalorder %s101, %s103
      %p110 = scmp.eq.s32.totalorder %s30, 1
      %p111 = por %p109, %p110
      %p112 = scmp.ne.s32.totalorder %s103, %s104
      %p113 = scmp.eq.s32.totalorder %s30, 0
      %p114 = por %p112, %p113
      %p115 = scmp.ne.s32.totalorder %s103, %s104
      %p116 = scmp.eq.s32.totalorder %s31, 1
      %p117 = por %p115, %p116
      %p119 = scmp.ne.s32.totalorder %s104, %s118
      %p120 = scmp.eq.s32.totalorder %s31, 0
      %p121 = por %p119, %p120
      %s123 = sadd.s32 %s122, 1
      %p126 = scmp.eq.s32.totalorder %s25, 1
      %p127 = scmp.ne.s32.totalorder %s122, %s124
      %p128 = scmp.eq.s32.totalorder %s25, 0
      %p129 = por %p127, %p128
      %p130 = scmp.ne.s32.totalorder %s122, %s124
      %p131 = scmp.eq.s32.totalorder %s30, 1
      %p132 = por %p130, %p131
      %p133 = scmp.ne.s32.totalorder %s124, %s125
      %p134 = scmp.eq.s32.totalorder %s30, 0
      %p135 = por %p133, %p134
      %p136 = scmp.ne.s32.totalorder %s124, %s125
      %p137 = scmp.eq.s32.totalorder %s31, 1
      %p138 = por %p136, %p137
      %p140 = scmp.ne.s32.totalorder %s125, %s139
      %p141 = scmp.eq.s32.totalorder %s31, 0
      %p142 = por %p140, %p141
      %s144 = sadd.s32 %s143, 1
      %p147 = scmp.eq.s32.totalorder %s25, 1
      %p148 = scmp.ne.s32.totalorder %s143, %s145
      %p149 = scmp.eq.s32.totalorder %s25, 0
      %p150 = por %p148, %p149
      %p151 = scmp.ne.s32.totalorder %s143, %s145
      %p152 = scmp.eq.s32.totalorder %s30, 1
      %p153 = por %p151, %p152
      %p154 = scmp.ne.s32.totalorder %s145, %s146
      %p155 = scmp.eq.s32.totalorder %s30, 0
      %p156 = por %p154, %p155
      %p157 = scmp.ne.s32.totalorder %s145, %s146
      %p158 = scmp.eq.s32.totalorder %s31, 1
      %p159 = por %p157, %p158
      %p161 = scmp.ne.s32.totalorder %s146, %s160
      %p162 = scmp.eq.s32.totalorder %s31, 0
      %p163 = por %p161, %p162
      %s165 = sadd.s32 %s164, 1
      %p168 = scmp.eq.s32.totalorder %s25, 1
      %p169 = scmp.ne.s32.totalorder %s164, %s166
      %p170 = scmp.eq.s32.totalorder %s25, 0
      %p171 = por %p169, %p170
      %p172 = scmp.ne.s32.totalorder %s164, %s166
      %p173 = scmp.eq.s32.totalorder %s30, 1
      %p174 = por %p172, %p173
      %p175 = scmp.ne.s32.totalorder %s166, %s167
      %p176 = scmp.eq.s32.totalorder %s30, 0
      %p177 = por %p175, %p176
      %p178 = scmp.ne.s32.totalorder %s166, %s167
      %p179 = scmp.eq.s32.totalorder %s31, 1
      %p180 = por %p178, %p179
      %p182 = scmp.ne.s32.totalorder %s167, %s181
      %p183 = scmp.eq.s32.totalorder %s31, 0
      %p184 = por %p182, %p183
      %s186 = sadd.s32 %s185, 1
      %p189 = scmp.eq.s32.totalorder %s25, 1
      %p190 = scmp.ne.s32.totalorder %s185, %s187
      %p191 = scmp.eq.s32.totalorder %s25, 0
      %p192 = por %p190, %p191
      %p193 = scmp.ne.s32.totalorder %s185, %s187
      %p194 = scmp.eq.s32.totalorder %s30, 1
      %p195 = por %p193, %p194
      %p196 = scmp.ne.s32.totalorder %s187, %s188
      %p197 = scmp.eq.s32.totalorder %s30, 0
      %p198 = por %p196, %p197
      %p199 = scmp.ne.s32.totalorder %s187, %s188
      %p200 = scmp.eq.s32.totalorder %s31, 1
      %p201 = por %p199, %p200
      %p203 = scmp.ne.s32.totalorder %s188, %s202
      %p204 = scmp.eq.s32.totalorder %s31, 0
      %p205 = por %p203, %p204
      %s207 = sadd.s32 %s206, 1
      %p210 = scmp.eq.s32.totalorder %s25, 1
      %p211 = scmp.ne.s32.totalorder %s206, %s208
      %p212 = scmp.eq.s32.totalorder %s25, 0
      %p213 = por %p211, %p212
      %p214 = scmp.ne.s32.totalorder %s206, %s208
      %p215 = scmp.eq.s32.totalorder %s30, 1
      %p216 = por %p214, %p215
      %p217 = scmp.ne.s32.totalorder %s208, %s209
      %p218 = scmp.eq.s32.totalorder %s30, 0
      %p219 = por %p217, %p218
      %p220 = scmp.ne.s32.totalorder %s208, %s209
      %p221 = scmp.eq.s32.totalorder %s31, 1
      %p222 = por %p220, %p221
      %p224 = scmp.ne.s32.totalorder %s209, %s223
      %p225 = scmp.eq.s32.totalorder %s31, 0
      %p226 = por %p224, %p225
      %s227 = ssub.s32 %s32, %s44
      %s228 = ssub.s32 %s33, %s40
      %s229 = sor.u32 %s227, %s228
      %p230 = scmp.eq.s32.totalorder %s229, 0
      %s232 = sadd.s32 %s231, 1
      %s233 = scalar_select %p230, %s231, %s232
      %p236 = pneg %p230
      %p237 = scmp.eq.s32.totalorder %s25, 1
      %p238 = por %p236, %p237
      %p239 = scmp.ne.s32.totalorder %s231, %s234
      %p240 = scmp.eq.s32.totalorder %s25, 0
      %p241 = por %p239, %p240
      %p242 = scmp.ne.s32.totalorder %s231, %s234
      %p243 = scmp.eq.s32.totalorder %s30, 1
      %p244 = por %p242, %p243
      %p245 = scmp.ne.s32.totalorder %s234, %s235
      %p246 = scmp.eq.s32.totalorder %s30, 0
      %p247 = por %p245, %p246
      %p248 = scmp.ne.s32.totalorder %s234, %s235
      %p249 = scmp.eq.s32.totalorder %s31, 1
      %p250 = por %p248, %p249
      %p252 = scmp.ne.s32.totalorder %s235, %s251
      %p253 = scmp.eq.s32.totalorder %s31, 0
      %p254 = por %p252, %p253
      %p255 = scmp.le.s32.totalorder 1, %s25
      %p256 = scmp.lt.s32.totalorder %s25, 3
      %p257 = pnand %p255, %p256
      %p258 = pneg %p257
      // Predicated region
      $region9: #{attention_block_forward.1} parent=5 // pred_check
        _
      $region10: #{attention_block_forward.1} parent=5 // pred_check_branch
        %260 = sbr.rel (%p257) target = $region12
      $region11: #{attention_block_forward.1} parent=5 // pred_region
        %s261 = ssub.s32 %s25, 1
        // Predicated region
        $region13: #{attention_block_forward.1} parent=11 // pred_check
          %p262 = pneg %p114
        $region14: #{attention_block_forward.1} parent=11 // pred_check_branch
          %264 = sbr.rel (%p262) target = $region16
        $region15: #{attention_block_forward.1} parent=11 // pred_region
          _
        $region16: #{attention_block_forward.1} parent=11 // pred_fallthru
          _
        // Predicated region
        $region17: #{attention_block_forward.1} parent=11 // pred_check
          %p265 = pneg %p135
        $region18: #{attention_block_forward.1} parent=11 // pred_check_branch
          %267 = sbr.rel (%p265) target = $region20
        $region19: #{attention_block_forward.1} parent=11 // pred_region
          _
        $region20: #{attention_block_forward.1} parent=11 // pred_fallthru
          _
        // Predicated region
        $region21: #{attention_block_forward.1} parent=11 // pred_check
          %p268 = pneg %p156
        $region22: #{attention_block_forward.1} parent=11 // pred_check_branch
          %270 = sbr.rel (%p268) target = $region24
        $region23: #{attention_block_forward.1} parent=11 // pred_region
          _
        $region24: #{attention_block_forward.1} parent=11 // pred_fallthru
          _
        // Predicated region
        $region25: #{attention_block_forward.1} parent=11 // pred_check
          %p271 = pneg %p177
        $region26: #{attention_block_forward.1} parent=11 // pred_check_branch
          %273 = sbr.rel (%p271) target = $region28
        $region27: #{attention_block_forward.1} parent=11 // pred_region
          _
        $region28: #{attention_block_forward.1} parent=11 // pred_fallthru
          _
        // Predicated region
        $region29: #{attention_block_forward.1} parent=11 // pred_check
          %p274 = pneg %p198
        $region30: #{attention_block_forward.1} parent=11 // pred_check_branch
          %276 = sbr.rel (%p274) target = $region32
        $region31: #{attention_block_forward.1} parent=11 // pred_region
          _
        $region32: #{attention_block_forward.1} parent=11 // pred_fallthru
          _
        // Predicated region
        $region33: #{attention_block_forward.1} parent=11 // pred_check
          %p277 = pneg %p219
        $region34: #{attention_block_forward.1} parent=11 // pred_check_branch
          %279 = sbr.rel (%p277) target = $region36
        $region35: #{attention_block_forward.1} parent=11 // pred_region
          _
        $region36: #{attention_block_forward.1} parent=11 // pred_fallthru
          _
      $region12: #{attention_block_forward.1} parent=5 // pred_fallthru
        _
      %p280 = scmp.lt.s32.totalorder %s25, 2
      // Predicated region
      $region37: #{attention_block_forward.1} parent=5 // pred_check
        %p281 = pneg %p280
      $region38: #{attention_block_forward.1} parent=5 // pred_check_branch
        %283 = sbr.rel (%p281) target = $region40
      $region39: #{attention_block_forward.1} parent=5 // pred_region
        // Predicated region
        $region41: #{attention_block_forward.1} parent=39 // pred_check
          %p284 = pneg %p59
        $region42: #{attention_block_forward.1} parent=39 // pred_check_branch
          %286 = sbr.rel (%p284) target = $region44
        $region43: #{attention_block_forward.1} parent=39 // pred_region
          %s287 = sand.u32 %s49, 1
          %s288 = scalar_lea.sflag [#allocation4], %s287
          %s289 = sand.u32 %s49, 1
          %s290 = smul.addr %s289, 256
          %s291 = scalar_lea.vmem [#allocation3], %s290
          %s292 = smul.u32 16, %s33
          %s294 = ssub.s32 4096, 4096
          %295 = vsyncadd %s288, %s294
          %s296 = smul.addr %s292, 2
          %s297 = smul.addr %s32, 32
          %s298 = sadd.s32 %s296, %s297
          %s299 = smul.addr %s298, 128
          %s300 = scalar_lea.hbm %s0, %s299
          %s301 = sshll.u32 %s291, 4
          %s302 = int_to_ptr.vmem [resolvable:$true] %s301
          %307 = dma.hbm_to_vmem [thread:$0]  %s300, 4096, %s302, %s288, 128, 128, 8
        $region44: #{attention_block_forward.1} parent=39 // pred_fallthru
          _
        // Predicated region
        $region45: #{attention_block_forward.1} parent=39 // pred_check
          %p308 = pneg %p87
        $region46: #{attention_block_forward.1} parent=39 // pred_check_branch
          %310 = sbr.rel (%p308) target = $region48
        $region47: #{attention_block_forward.1} parent=39 // pred_region
          %s311 = sand.u32 %s77, 1
          %s312 = scalar_lea.sflag [#allocation7], %s311
          %s313 = sand.u32 %s77, 1
          %s314 = smul.addr %s313, 256
          %s315 = scalar_lea.vmem [#allocation6], %s314
          %s316 = smul.u32 16, %s33
          %s318 = ssub.s32 4096, 4096
          %319 = vsyncadd %s312, %s318
          %s320 = smul.addr %s316, 2
          %s321 = smul.addr %s32, 32
          %s322 = sadd.s32 %s320, %s321
          %s323 = smul.addr %s322, 128
          %s324 = scalar_lea.hbm %s1, %s323
          %s325 = sshll.u32 %s315, 4
          %s326 = int_to_ptr.vmem [resolvable:$true] %s325
          %331 = dma.hbm_to_vmem [thread:$0]  %s324, 4096, %s326, %s312, 128, 128, 8
        $region48: #{attention_block_forward.1} parent=39 // pred_fallthru
          _
      $region40: #{attention_block_forward.1} parent=5 // pred_fallthru
        _
      %p332 = scmp.le.s32.totalorder 1, %s25
      %p333 = scmp.lt.s32.totalorder %s25, 3
      %p334 = pnand %p332, %p333
      %p335 = pneg %p334
      // Predicated region
      $region49: #{attention_block_forward.1} parent=5 // pred_check
        _
      $region50: #{attention_block_forward.1} parent=5 // pred_check_branch
        %337 = sbr.rel (%p334) target = $region52
      $region51: #{attention_block_forward.1} parent=5 // pred_region
        %s338 = ssub.s32 %s25, 1
        %s339 = sand.u32 %s52, 1
        %s340 = scalar_lea.sflag [#allocation4], %s339
        %s341 = sand.u32 %s52, 1
        %s342 = smul.addr %s341, 256
        %s343 = scalar_lea.vmem [#allocation3], %s342
        // Predicated region
        $region53: #{attention_block_forward.1} parent=51 // pred_check
          %p344 = pneg %p65
        $region54: #{attention_block_forward.1} parent=51 // pred_check_branch
          %346 = sbr.rel (%p344) target = $region56
        $region55: #{attention_block_forward.1} parent=51 // pred_region
          %347 = dma.done %s340, 4096
        $region56: #{attention_block_forward.1} parent=51 // pred_fallthru
          _
        %s348 = sand.u32 %s80, 1
        %s349 = scalar_lea.sflag [#allocation7], %s348
        %s350 = sand.u32 %s80, 1
        %s351 = smul.addr %s350, 256
        %s352 = scalar_lea.vmem [#allocation6], %s351
        // Predicated region
        $region57: #{attention_block_forward.1} parent=51 // pred_check
          %p353 = pneg %p93
        $region58: #{attention_block_forward.1} parent=51 // pred_check_branch
          %355 = sbr.rel (%p353) target = $region60
        $region59: #{attention_block_forward.1} parent=51 // pred_region
          %356 = dma.done %s349, 4096
        $region60: #{attention_block_forward.1} parent=51 // pred_fallthru
          _
        %s357 = sand.u32 %s52, 1
        %s358 = scalar_lea.sflag [#allocation4], %s357
        %s359 = sand.u32 %s52, 1
        %s360 = smul.addr %s359, 256
        %s361 = scalar_lea.vmem [#allocation3], %s360
        %p362 = pneg %p65
        %p363 = pneg %p62
        %s364 = sand.u32 %s80, 1
        %s365 = scalar_lea.sflag [#allocation7], %s364
        %s366 = sand.u32 %s80, 1
        %s367 = smul.addr %s366, 256
        %s368 = scalar_lea.vmem [#allocation6], %s367
        %p369 = pneg %p93
        %p370 = pneg %p90
        %p371 = pneg %p114
        %p372 = pneg %p111
        %p373 = pneg %p135
        %p374 = pneg %p132
        %p375 = pneg %p156
        %p376 = pneg %p153
        %p377 = pneg %p177
        %p378 = pneg %p174
        %p379 = pneg %p198
        %p380 = pneg %p195
        %p381 = pneg %p219
        %p382 = pneg %p216
        %p383 = pneg %p247
        %p384 = pneg %p244
        %s385 = sand.u32 %s234, 1
        %s386 = scalar_lea.sflag [#allocation5], %s385
        %s387 = sand.u32 %s234, 1
        %s388 = smul.addr %s387, 256
        %s389 = scalar_lea.vmem [#allocation8], %s388
        %s390 = smul.u32 16, %s35
        %s391 = smul.u32 16, %s35
        %s392 = smul.u32 16, %s35
        %v394 = vld [vmem:[%s343] sm:$0xff]
        %v395 = vld [vmem:[%s343 + $0x8] sm:$0xff]
        %v396 = vld [vmem:[%s343 + $0x10] sm:$0xff]
        %v397 = vld [vmem:[%s343 + $0x18] sm:$0xff]
        %v398 = vld [vmem:[%s343 + $0x20] sm:$0xff]
        %v399 = vld [vmem:[%s343 + $0x28] sm:$0xff]
        %v400 = vld [vmem:[%s343 + $0x30] sm:$0xff]
        %v401 = vld [vmem:[%s343 + $0x38] sm:$0xff]
        %v402 = vld [vmem:[%s343 + $0x40] sm:$0xff]
        %v403 = vld [vmem:[%s343 + $0x48] sm:$0xff]
        %v404 = vld [vmem:[%s343 + $0x50] sm:$0xff]
        %v405 = vld [vmem:[%s343 + $0x58] sm:$0xff]
        %v406 = vld [vmem:[%s343 + $0x60] sm:$0xff]
        %v407 = vld [vmem:[%s343 + $0x68] sm:$0xff]
        %v408 = vld [vmem:[%s343 + $0x70] sm:$0xff]
        %v409 = vld [vmem:[%s343 + $0x78] sm:$0xff]
        %v410 = vld [vmem:[%s343 + $0x80] sm:$0xff]
        %v411 = vld [vmem:[%s343 + $0x88] sm:$0xff]
        %v412 = vld [vmem:[%s343 + $0x90] sm:$0xff]
        %v413 = vld [vmem:[%s343 + $0x98] sm:$0xff]
        %v414 = vld [vmem:[%s343 + $0xa0] sm:$0xff]
        %v415 = vld [vmem:[%s343 + $0xa8] sm:$0xff]
        %v416 = vld [vmem:[%s343 + $0xb0] sm:$0xff]
        %v417 = vld [vmem:[%s343 + $0xb8] sm:$0xff]
        %v418 = vld [vmem:[%s343 + $0xc0] sm:$0xff]
        %v419 = vld [vmem:[%s343 + $0xc8] sm:$0xff]
        %v420 = vld [vmem:[%s343 + $0xd0] sm:$0xff]
        %v421 = vld [vmem:[%s343 + $0xd8] sm:$0xff]
        %v422 = vld [vmem:[%s343 + $0xe0] sm:$0xff]
        %v423 = vld [vmem:[%s343 + $0xe8] sm:$0xff]
        %v424 = vld [vmem:[%s343 + $0xf0] sm:$0xff]
        %v425 = vld [vmem:[%s343 + $0xf8] sm:$0xff]
        %v426 = vld [vmem:[%s352] sm:$0xff]
        %v427 = vld [vmem:[%s352 + $0x8] sm:$0xff]
        %v428 = vld [vmem:[%s352 + $0x10] sm:$0xff]
        %v429 = vld [vmem:[%s352 + $0x18] sm:$0xff]
        %v430 = vld [vmem:[%s352 + $0x20] sm:$0xff]
        %v431 = vld [vmem:[%s352 + $0x28] sm:$0xff]
        %v432 = vld [vmem:[%s352 + $0x30] sm:$0xff]
        %v433 = vld [vmem:[%s352 + $0x38] sm:$0xff]
        %v434 = vld [vmem:[%s352 + $0x40] sm:$0xff]
        %v435 = vld [vmem:[%s352 + $0x48] sm:$0xff]
        %v436 = vld [vmem:[%s352 + $0x50] sm:$0xff]
        %v437 = vld [vmem:[%s352 + $0x58] sm:$0xff]
        %v438 = vld [vmem:[%s352 + $0x60] sm:$0xff]
        %v439 = vld [vmem:[%s352 + $0x68] sm:$0xff]
        %v440 = vld [vmem:[%s352 + $0x70] sm:$0xff]
        %v441 = vld [vmem:[%s352 + $0x78] sm:$0xff]
        %v442 = vld [vmem:[%s352 + $0x80] sm:$0xff]
        %v443 = vld [vmem:[%s352 + $0x88] sm:$0xff]
        %v444 = vld [vmem:[%s352 + $0x90] sm:$0xff]
        %v445 = vld [vmem:[%s352 + $0x98] sm:$0xff]
        %v446 = vld [vmem:[%s352 + $0xa0] sm:$0xff]
        %v447 = vld [vmem:[%s352 + $0xa8] sm:$0xff]
        %v448 = vld [vmem:[%s352 + $0xb0] sm:$0xff]
        %v449 = vld [vmem:[%s352 + $0xb8] sm:$0xff]
        %v450 = vld [vmem:[%s352 + $0xc0] sm:$0xff]
        %v451 = vld [vmem:[%s352 + $0xc8] sm:$0xff]
        %v452 = vld [vmem:[%s352 + $0xd0] sm:$0xff]
        %v453 = vld [vmem:[%s352 + $0xd8] sm:$0xff]
        %v454 = vld [vmem:[%s352 + $0xe0] sm:$0xff]
        %v455 = vld [vmem:[%s352 + $0xe8] sm:$0xff]
        %v456 = vld [vmem:[%s352 + $0xf0] sm:$0xff]
        %v457 = vld [vmem:[%s352 + $0xf8] sm:$0xff]
        %v458 = vpack.c.bf16 %v395, %v394
        %v459 = vpack.c.bf16 %v397, %v396
        %v460 = vpack.c.bf16 %v399, %v398
        %v461 = vpack.c.bf16 %v401, %v400
        %v462 = vpack.c.bf16 %v403, %v402
        %v463 = vpack.c.bf16 %v405, %v404
        %v464 = vpack.c.bf16 %v407, %v406
        %v465 = vpack.c.bf16 %v409, %v408
        %v466 = vpack.c.bf16 %v411, %v410
        %v467 = vpack.c.bf16 %v413, %v412
        %v468 = vpack.c.bf16 %v415, %v414
        %v469 = vpack.c.bf16 %v417, %v416
        %v470 = vpack.c.bf16 %v419, %v418
        %v471 = vpack.c.bf16 %v421, %v420
        %v472 = vpack.c.bf16 %v423, %v422
        %v473 = vpack.c.bf16 %v425, %v424
        %v474 = vld [vmem:[%s2] sm:$0xf]
        %v475 = vld [vmem:[%s2 + $0x4] sm:$0xf]
        %v476 = vld [vmem:[%s2 + $0x8] sm:$0xf]
        %v477 = vld [vmem:[%s2 + $0xc] sm:$0xf]
        %v478 = vld [vmem:[%s3] sm:$0x1]
        %v480 = vlaneseq
        %v481 = vshrl.u32 %v480, 7
        %v482 = vsub.s32 0, %v481
        %v483 = vrot.slane %v478, %v482
        %v489 = vunpack.c.l.b16 %v474
        %v490 = vunpack.c.l.b16 %v475
        %v491 = vunpack.c.l.b16 %v476
        %v492 = vunpack.c.l.b16 %v477
        %v493 = vpack.c.b16 %v490, %v489
        %v494 = vpack.c.b16 %v492, %v491
        %vm497 = vcmask 261120
        %v499 = vsel %vm497, %v458, 0
        %v502 = vsel %vm497, %v459, 0
        %v505 = vsel %vm497, %v460, 0
        %v508 = vsel %vm497, %v461, 0
        %v511 = vsel %vm497, %v462, 0
        %v514 = vsel %vm497, %v463, 0
        %v517 = vsel %vm497, %v464, 0
        %v520 = vsel %vm497, %v465, 0
        %v523 = vsel %vm497, %v466, 0
        %v526 = vsel %vm497, %v467, 0
        %v529 = vsel %vm497, %v468, 0
        %v532 = vsel %vm497, %v469, 0
        %v535 = vsel %vm497, %v470, 0
        %v538 = vsel %vm497, %v471, 0
        %v541 = vsel %vm497, %v472, 0
        %v544 = vsel %vm497, %v473, 0
        %546 = vmatprep.subr.bf16.mxu0 0
        %547 = vmatpush1.bf16.msra.mxu0 0
        %548 = vmatprep.subr.bf16.mxu0 0
        %549 = vmatpush1.bf16.msra.mxu0 0
        %550 = vmatprep.subr.bf16.mxu0 0
        %551 = vmatpush1.bf16.msra.mxu0 0
        %552 = vmatprep.subr.bf16.mxu0 0
        %553 = vmatpush1.bf16.msra.mxu0 0
        %554 = vmatprep.subr.bf16.mxu0 0
        %555 = vmatpush1.bf16.msra.mxu0 0
        %556 = vmatprep.subr.bf16.mxu0 0
        %557 = vmatpush1.bf16.msra.mxu0 0
        %558 = vmatprep.subr.bf16.mxu0 0
        %559 = vmatpush1.bf16.msra.mxu0 %v494
        %560 = vmatprep.subr.bf16.mxu0 0
        %561 = vmatpush1.bf16.msra.mxu0 %v493
        %562 = vmatprep.subr.bf16.mxu0 0
        %563 = vmatpush2.bf16.msra.mxu0 0
        %564 = vmatprep.subr.bf16.mxu0 0
        %565 = vmatpush2.bf16.msra.mxu0 0
        %566 = vmatprep.subr.bf16.mxu0 0
        %567 = vmatpush2.bf16.msra.mxu0 0
        %568 = vmatprep.subr.bf16.mxu0 0
        %569 = vmatpush2.bf16.msra.mxu0 0
        %570 = vmatprep.subr.bf16.mxu0 0
        %571 = vmatpush2.bf16.msra.mxu0 0
        %572 = vmatprep.subr.bf16.mxu0 0
        %573 = vmatpush2.bf16.msra.mxu0 0
        %574 = vmatprep.subr.bf16.mxu0 0
        %575 = vmatpush2.bf16.msra.mxu0 0
        %576 = vmatprep.subr.bf16.mxu0 0
        %577 = vmatpush2.bf16.msra.mxu0 0
        %578 = vmatprep.mubr.bf16.mxu0 0
        %579 = vmatmul.mubr.bf16.gmra.mxu0 %v499
        %v580 = vpop.f32.mrf.mxu0
        %v581 = vadd.f32 %v483, %v580
        %v582 = vpop.f32.mrf.mxu0
        %v583 = vpop.f32.mrf.mxu0
        %v584 = vadd.f32 %v483, %v583
        %v585 = vpop.f32.mrf.mxu0
        %586 = vmatprep.mubr.bf16.mxu0 0
        %587 = vmatmul.mubr.bf16.gmra.mxu0 %v502
        %v588 = vpop.f32.mrf.mxu0
        %v589 = vadd.f32 %v483, %v588
        %v590 = vpop.f32.mrf.mxu0
        %v591 = vpop.f32.mrf.mxu0
        %v592 = vadd.f32 %v483, %v591
        %v593 = vpop.f32.mrf.mxu0
        %594 = vmatprep.mubr.bf16.mxu0 0
        %595 = vmatmul.mubr.bf16.gmra.mxu0 %v505
        %v596 = vpop.f32.mrf.mxu0
        %v597 = vadd.f32 %v483, %v596
        %v598 = vpop.f32.mrf.mxu0
        %v599 = vpop.f32.mrf.mxu0
        %v600 = vadd.f32 %v483, %v599
        %v601 = vpop.f32.mrf.mxu0
        %602 = vmatprep.mubr.bf16.mxu0 0
        %603 = vmatmul.mubr.bf16.gmra.mxu0 %v508
        %v604 = vpop.f32.mrf.mxu0
        %v605 = vadd.f32 %v483, %v604
        %v606 = vpop.f32.mrf.mxu0
        %v607 = vpop.f32.mrf.mxu0
        %v608 = vadd.f32 %v483, %v607
        %v609 = vpop.f32.mrf.mxu0
        %610 = vmatprep.mubr.bf16.mxu0 0
        %611 = vmatmul.mubr.bf16.gmra.mxu0 %v511
        %v612 = vpop.f32.mrf.mxu0
        %v613 = vadd.f32 %v483, %v612
        %v614 = vpop.f32.mrf.mxu0
        %v615 = vpop.f32.mrf.mxu0
        %v616 = vadd.f32 %v483, %v615
        %v617 = vpop.f32.mrf.mxu0
        %618 = vmatprep.mubr.bf16.mxu0 0
        %619 = vmatmul.mubr.bf16.gmra.mxu0 %v514
        %v620 = vpop.f32.mrf.mxu0
        %v621 = vadd.f32 %v483, %v620
        %v622 = vpop.f32.mrf.mxu0
        %v623 = vpop.f32.mrf.mxu0
        %v624 = vadd.f32 %v483, %v623
        %v625 = vpop.f32.mrf.mxu0
        %626 = vmatprep.mubr.bf16.mxu0 0
        %627 = vmatmul.mubr.bf16.gmra.mxu0 %v517
        %v628 = vpop.f32.mrf.mxu0
        %v629 = vadd.f32 %v483, %v628
        %v630 = vpop.f32.mrf.mxu0
        %v631 = vpop.f32.mrf.mxu0
        %v632 = vadd.f32 %v483, %v631
        %v633 = vpop.f32.mrf.mxu0
        %634 = vmatprep.mubr.bf16.mxu0 0
        %635 = vmatmul.mubr.bf16.gmra.mxu0 %v520
        %v636 = vpop.f32.mrf.mxu0
        %v637 = vadd.f32 %v483, %v636
        %v638 = vpop.f32.mrf.mxu0
        %v639 = vpop.f32.mrf.mxu0
        %v640 = vadd.f32 %v483, %v639
        %v641 = vpop.f32.mrf.mxu0
        %642 = vmatprep.mubr.bf16.mxu0 0
        %643 = vmatmul.mubr.bf16.gmra.mxu0 %v523
        %v644 = vpop.f32.mrf.mxu0
        %v645 = vadd.f32 %v483, %v644
        %v646 = vpop.f32.mrf.mxu0
        %v647 = vpop.f32.mrf.mxu0
        %v648 = vadd.f32 %v483, %v647
        %v649 = vpop.f32.mrf.mxu0
        %650 = vmatprep.mubr.bf16.mxu0 0
        %651 = vmatmul.mubr.bf16.gmra.mxu0 %v526
        %v652 = vpop.f32.mrf.mxu0
        %v653 = vadd.f32 %v483, %v652
        %v654 = vpop.f32.mrf.mxu0
        %v655 = vpop.f32.mrf.mxu0
        %v656 = vadd.f32 %v483, %v655
        %v657 = vpop.f32.mrf.mxu0
        %658 = vmatprep.mubr.bf16.mxu0 0
        %659 = vmatmul.mubr.bf16.gmra.mxu0 %v529
        %v660 = vpop.f32.mrf.mxu0
        %v661 = vadd.f32 %v483, %v660
        %v662 = vpop.f32.mrf.mxu0
        %v663 = vpop.f32.mrf.mxu0
        %v664 = vadd.f32 %v483, %v663
        %v665 = vpop.f32.mrf.mxu0
        %666 = vmatprep.mubr.bf16.mxu0 0
        %667 = vmatmul.mubr.bf16.gmra.mxu0 %v532
        %v668 = vpop.f32.mrf.mxu0
        %v669 = vadd.f32 %v483, %v668
        %v670 = vpop.f32.mrf.mxu0
        %v671 = vpop.f32.mrf.mxu0
        %v672 = vadd.f32 %v483, %v671
        %v673 = vpop.f32.mrf.mxu0
        %674 = vmatprep.mubr.bf16.mxu0 0
        %675 = vmatmul.mubr.bf16.gmra.mxu0 %v535
        %v676 = vpop.f32.mrf.mxu0
        %v677 = vadd.f32 %v483, %v676
        %v678 = vpop.f32.mrf.mxu0
        %v679 = vpop.f32.mrf.mxu0
        %v680 = vadd.f32 %v483, %v679
        %v681 = vpop.f32.mrf.mxu0
        %682 = vmatprep.mubr.bf16.mxu0 0
        %683 = vmatmul.mubr.bf16.gmra.mxu0 %v538
        %v684 = vpop.f32.mrf.mxu0
        %v685 = vadd.f32 %v483, %v684
        %v686 = vpop.f32.mrf.mxu0
        %v687 = vpop.f32.mrf.mxu0
        %v688 = vadd.f32 %v483, %v687
        %v689 = vpop.f32.mrf.mxu0
        %690 = vmatprep.mubr.bf16.mxu0 0
        %691 = vmatmul.mubr.bf16.gmra.mxu0 %v541
        %v692 = vpop.f32.mrf.mxu0
        %v693 = vadd.f32 %v483, %v692
        %v694 = vpop.f32.mrf.mxu0
        %v695 = vpop.f32.mrf.mxu0
        %v696 = vadd.f32 %v483, %v695
        %v697 = vpop.f32.mrf.mxu0
        %698 = vmatprep.mubr.bf16.mxu0 0
        %699 = vmatmul.mubr.bf16.gmra.mxu0 %v544
        %v700 = vpop.f32.mrf.mxu0
        %v701 = vadd.f32 %v483, %v700
        %v702 = vpop.f32.mrf.mxu0
        %v703 = vpop.f32.mrf.mxu0
        %v704 = vadd.f32 %v483, %v703
        %v705 = vpop.f32.mrf.mxu0
        %706 = vdwg.mxu0
        %v707 = vpack.c.bf16 %v427, %v426
        %v708 = vpack.c.bf16 %v429, %v428
        %v709 = vpack.c.bf16 %v431, %v430
        %v710 = vpack.c.bf16 %v433, %v432
        %v711 = vpack.c.bf16 %v435, %v434
        %v712 = vpack.c.bf16 %v437, %v436
        %v713 = vpack.c.bf16 %v439, %v438
        %v714 = vpack.c.bf16 %v441, %v440
        %v715 = vpack.c.bf16 %v443, %v442
        %v716 = vpack.c.bf16 %v445, %v444
        %v717 = vpack.c.bf16 %v447, %v446
        %v718 = vpack.c.bf16 %v449, %v448
        %v719 = vpack.c.bf16 %v451, %v450
        %v720 = vpack.c.bf16 %v453, %v452
        %v721 = vpack.c.bf16 %v455, %v454
        %v722 = vpack.c.bf16 %v457, %v456
        %v723 = vld [vmem:[%s4] sm:$0xf]
        %v724 = vld [vmem:[%s4 + $0x4] sm:$0xf]
        %v725 = vld [vmem:[%s4 + $0x8] sm:$0xf]
        %v726 = vld [vmem:[%s4 + $0xc] sm:$0xf]
        %v731 = vunpack.c.l.b16 %v723
        %v732 = vunpack.c.l.b16 %v724
        %v733 = vunpack.c.l.b16 %v725
        %v734 = vunpack.c.l.b16 %v726
        %v735 = vpack.c.b16 %v732, %v731
        %v736 = vpack.c.b16 %v734, %v733
        %v740 = vsel %vm497, %v707, 0
        %v743 = vsel %vm497, %v708, 0
        %v746 = vsel %vm497, %v709, 0
        %v749 = vsel %vm497, %v710, 0
        %v752 = vsel %vm497, %v711, 0
        %v755 = vsel %vm497, %v712, 0
        %v758 = vsel %vm497, %v713, 0
        %v761 = vsel %vm497, %v714, 0
        %v764 = vsel %vm497, %v715, 0
        %v767 = vsel %vm497, %v716, 0
        %v770 = vsel %vm497, %v717, 0
        %v773 = vsel %vm497, %v718, 0
        %v776 = vsel %vm497, %v719, 0
        %v779 = vsel %vm497, %v720, 0
        %v782 = vsel %vm497, %v721, 0
        %v785 = vsel %vm497, %v722, 0
        %787 = vmatprep.subr.bf16.mxu0 0
        %788 = vmatpush1.bf16.msra.mxu0 0
        %789 = vmatprep.subr.bf16.mxu0 0
        %790 = vmatpush1.bf16.msra.mxu0 0
        %791 = vmatprep.subr.bf16.mxu0 0
        %792 = vmatpush1.bf16.msra.mxu0 0
        %793 = vmatprep.subr.bf16.mxu0 0
        %794 = vmatpush1.bf16.msra.mxu0 0
        %795 = vmatprep.subr.bf16.mxu0 0
        %796 = vmatpush1.bf16.msra.mxu0 0
        %797 = vmatprep.subr.bf16.mxu0 0
        %798 = vmatpush1.bf16.msra.mxu0 0
        %799 = vmatprep.subr.bf16.mxu0 0
        %800 = vmatpush1.bf16.msra.mxu0 %v736
        %801 = vmatprep.subr.bf16.mxu0 0
        %802 = vmatpush1.bf16.msra.mxu0 %v735
        %803 = vmatprep.subr.bf16.mxu0 0
        %804 = vmatpush2.bf16.msra.mxu0 0
        %805 = vmatprep.subr.bf16.mxu0 0
        %806 = vmatpush2.bf16.msra.mxu0 0
        %807 = vmatprep.subr.bf16.mxu0 0
        %808 = vmatpush2.bf16.msra.mxu0 0
        %809 = vmatprep.subr.bf16.mxu0 0
        %810 = vmatpush2.bf16.msra.mxu0 0
        %811 = vmatprep.subr.bf16.mxu0 0
        %812 = vmatpush2.bf16.msra.mxu0 0
        %813 = vmatprep.subr.bf16.mxu0 0
        %814 = vmatpush2.bf16.msra.mxu0 0
        %815 = vmatprep.subr.bf16.mxu0 0
        %816 = vmatpush2.bf16.msra.mxu0 0
        %817 = vmatprep.subr.bf16.mxu0 0
        %818 = vmatpush2.bf16.msra.mxu0 0
        %819 = vmatprep.mubr.bf16.mxu0 0
        %820 = vmatmul.mubr.bf16.gmra.mxu0 %v740
        %v821 = vpop.f32.mrf.mxu0
        %v822 = vadd.f32 0.0, %v821
        %v823 = vpop.f32.mrf.mxu0
        %v824 = vpop.f32.mrf.mxu0
        %v825 = vadd.f32 0.0, %v824
        %v826 = vpop.f32.mrf.mxu0
        %827 = vmatprep.mubr.bf16.mxu0 0
        %828 = vmatmul.mubr.bf16.gmra.mxu0 %v743
        %v829 = vpop.f32.mrf.mxu0
        %v830 = vadd.f32 0.0, %v829
        %v831 = vpop.f32.mrf.mxu0
        %v832 = vpop.f32.mrf.mxu0
        %v833 = vadd.f32 0.0, %v832
        %v834 = vpop.f32.mrf.mxu0
        %835 = vmatprep.mubr.bf16.mxu0 0
        %836 = vmatmul.mubr.bf16.gmra.mxu0 %v746
        %v837 = vpop.f32.mrf.mxu0
        %v838 = vadd.f32 0.0, %v837
        %v839 = vpop.f32.mrf.mxu0
        %v840 = vpop.f32.mrf.mxu0
        %v841 = vadd.f32 0.0, %v840
        %v842 = vpop.f32.mrf.mxu0
        %843 = vmatprep.mubr.bf16.mxu0 0
        %844 = vmatmul.mubr.bf16.gmra.mxu0 %v749
        %v845 = vpop.f32.mrf.mxu0
        %v846 = vadd.f32 0.0, %v845
        %v847 = vpop.f32.mrf.mxu0
        %v848 = vpop.f32.mrf.mxu0
        %v849 = vadd.f32 0.0, %v848
        %v850 = vpop.f32.mrf.mxu0
        %851 = vmatprep.mubr.bf16.mxu0 0
        %852 = vmatmul.mubr.bf16.gmra.mxu0 %v752
        %v853 = vpop.f32.mrf.mxu0
        %v854 = vadd.f32 0.0, %v853
        %v855 = vpop.f32.mrf.mxu0
        %v856 = vpop.f32.mrf.mxu0
        %v857 = vadd.f32 0.0, %v856
        %v858 = vpop.f32.mrf.mxu0
        %859 = vmatprep.mubr.bf16.mxu0 0
        %860 = vmatmul.mubr.bf16.gmra.mxu0 %v755
        %v861 = vpop.f32.mrf.mxu0
        %v862 = vadd.f32 0.0, %v861
        %v863 = vpop.f32.mrf.mxu0
        %v864 = vpop.f32.mrf.mxu0
        %v865 = vadd.f32 0.0, %v864
        %v866 = vpop.f32.mrf.mxu0
        %867 = vmatprep.mubr.bf16.mxu0 0
        %868 = vmatmul.mubr.bf16.gmra.mxu0 %v758
        %v869 = vpop.f32.mrf.mxu0
        %v870 = vadd.f32 0.0, %v869
        %v871 = vpop.f32.mrf.mxu0
        %v872 = vpop.f32.mrf.mxu0
        %v873 = vadd.f32 0.0, %v872
        %v874 = vpop.f32.mrf.mxu0
        %875 = vmatprep.mubr.bf16.mxu0 0
        %876 = vmatmul.mubr.bf16.gmra.mxu0 %v761
        %v877 = vpop.f32.mrf.mxu0
        %v878 = vadd.f32 0.0, %v877
        %v879 = vpop.f32.mrf.mxu0
        %v880 = vpop.f32.mrf.mxu0
        %v881 = vadd.f32 0.0, %v880
        %v882 = vpop.f32.mrf.mxu0
        %883 = vmatprep.mubr.bf16.mxu0 0
        %884 = vmatmul.mubr.bf16.gmra.mxu0 %v764
        %v885 = vpop.f32.mrf.mxu0
        %v886 = vadd.f32 0.0, %v885
        %v887 = vpop.f32.mrf.mxu0
        %v888 = vpop.f32.mrf.mxu0
        %v889 = vadd.f32 0.0, %v888
        %v890 = vpop.f32.mrf.mxu0
        %891 = vmatprep.mubr.bf16.mxu0 0
        %892 = vmatmul.mubr.bf16.gmra.mxu0 %v767
        %v893 = vpop.f32.mrf.mxu0
        %v894 = vadd.f32 0.0, %v893
        %v895 = vpop.f32.mrf.mxu0
        %v896 = vpop.f32.mrf.mxu0
        %v897 = vadd.f32 0.0, %v896
        %v898 = vpop.f32.mrf.mxu0
        %899 = vmatprep.mubr.bf16.mxu0 0
        %900 = vmatmul.mubr.bf16.gmra.mxu0 %v770
        %v901 = vpop.f32.mrf.mxu0
        %v902 = vadd.f32 0.0, %v901
        %v903 = vpop.f32.mrf.mxu0
        %v904 = vpop.f32.mrf.mxu0
        %v905 = vadd.f32 0.0, %v904
        %v906 = vpop.f32.mrf.mxu0
        %907 = vmatprep.mubr.bf16.mxu0 0
        %908 = vmatmul.mubr.bf16.gmra.mxu0 %v773
        %v909 = vpop.f32.mrf.mxu0
        %v910 = vadd.f32 0.0, %v909
        %v911 = vpop.f32.mrf.mxu0
        %v912 = vpop.f32.mrf.mxu0
        %v913 = vadd.f32 0.0, %v912
        %v914 = vpop.f32.mrf.mxu0
        %915 = vmatprep.mubr.bf16.mxu0 0
        %916 = vmatmul.mubr.bf16.gmra.mxu0 %v776
        %v917 = vpop.f32.mrf.mxu0
        %v918 = vadd.f32 0.0, %v917
        %v919 = vpop.f32.mrf.mxu0
        %v920 = vpop.f32.mrf.mxu0
        %v921 = vadd.f32 0.0, %v920
        %v922 = vpop.f32.mrf.mxu0
        %923 = vmatprep.mubr.bf16.mxu0 0
        %924 = vmatmul.mubr.bf16.gmra.mxu0 %v779
        %v925 = vpop.f32.mrf.mxu0
        %v926 = vadd.f32 0.0, %v925
        %v927 = vpop.f32.mrf.mxu0
        %v928 = vpop.f32.mrf.mxu0
        %v929 = vadd.f32 0.0, %v928
        %v930 = vpop.f32.mrf.mxu0
        %931 = vmatprep.mubr.bf16.mxu0 0
        %932 = vmatmul.mubr.bf16.gmra.mxu0 %v782
        %v933 = vpop.f32.mrf.mxu0
        %v934 = vadd.f32 0.0, %v933
        %v935 = vpop.f32.mrf.mxu0
        %v936 = vpop.f32.mrf.mxu0
        %v937 = vadd.f32 0.0, %v936
        %v938 = vpop.f32.mrf.mxu0
        %939 = vmatprep.mubr.bf16.mxu0 0
        %940 = vmatmul.mubr.bf16.gmra.mxu0 %v785
        %v941 = vpop.f32.mrf.mxu0
        %v942 = vadd.f32 0.0, %v941
        %v943 = vpop.f32.mrf.mxu0
        %v944 = vpop.f32.mrf.mxu0
        %v945 = vadd.f32 0.0, %v944
        %v946 = vpop.f32.mrf.mxu0
        %947 = vdwg.mxu0
        %v948 = vadd.f32 %v581, %v822
        %v949 = vadd.f32 %v584, %v825
        %v950 = vadd.f32 %v589, %v830
        %v951 = vadd.f32 %v592, %v833
        %v952 = vadd.f32 %v597, %v838
        %v953 = vadd.f32 %v600, %v841
        %v954 = vadd.f32 %v605, %v846
        %v955 = vadd.f32 %v608, %v849
        %v956 = vadd.f32 %v613, %v854
        %v957 = vadd.f32 %v616, %v857
        %v958 = vadd.f32 %v621, %v862
        %v959 = vadd.f32 %v624, %v865
        %v960 = vadd.f32 %v629, %v870
        %v961 = vadd.f32 %v632, %v873
        %v962 = vadd.f32 %v637, %v878
        %v963 = vadd.f32 %v640, %v881
        %v964 = vadd.f32 %v645, %v886
        %v965 = vadd.f32 %v648, %v889
        %v966 = vadd.f32 %v653, %v894
        %v967 = vadd.f32 %v656, %v897
        %v968 = vadd.f32 %v661, %v902
        %v969 = vadd.f32 %v664, %v905
        %v970 = vadd.f32 %v669, %v910
        %v971 = vadd.f32 %v672, %v913
        %v972 = vadd.f32 %v677, %v918
        %v973 = vadd.f32 %v680, %v921
        %v974 = vadd.f32 %v685, %v926
        %v975 = vadd.f32 %v688, %v929
        %v976 = vadd.f32 %v693, %v934
        %v977 = vadd.f32 %v696, %v937
        %v978 = vadd.f32 %v701, %v942
        %v979 = vadd.f32 %v704, %v945
        %v980 = vld [vmem:[%s5] sm:$0x1]
        %v982 = vlaneseq
        %v983 = vshrl.u32 %v982, 7
        %v984 = vsub.s32 0, %v983
        %v985 = vrot.slane %v980, %v984
        %v987 = vadd.f32 %v948, %v985
        %v988 = vadd.f32 %v949, %v985
        %v989 = vadd.f32 %v950, %v985
        %v990 = vadd.f32 %v951, %v985
        %v991 = vadd.f32 %v952, %v985
        %v992 = vadd.f32 %v953, %v985
        %v993 = vadd.f32 %v954, %v985
        %v994 = vadd.f32 %v955, %v985
        %v995 = vadd.f32 %v956, %v985
        %v996 = vadd.f32 %v957, %v985
        %v997 = vadd.f32 %v958, %v985
        %v998 = vadd.f32 %v959, %v985
        %v999 = vadd.f32 %v960, %v985
        %v1000 = vadd.f32 %v961, %v985
        %v1001 = vadd.f32 %v962, %v985
        %v1002 = vadd.f32 %v963, %v985
        %v1003 = vadd.f32 %v964, %v985
        %v1004 = vadd.f32 %v965, %v985
        %v1005 = vadd.f32 %v966, %v985
        %v1006 = vadd.f32 %v967, %v985
        %v1007 = vadd.f32 %v968, %v985
        %v1008 = vadd.f32 %v969, %v985
        %v1009 = vadd.f32 %v970, %v985
        %v1010 = vadd.f32 %v971, %v985
        %v1011 = vadd.f32 %v972, %v985
        %v1012 = vadd.f32 %v973, %v985
        %v1013 = vadd.f32 %v974, %v985
        %v1014 = vadd.f32 %v975, %v985
        %v1015 = vadd.f32 %v976, %v985
        %v1016 = vadd.f32 %v977, %v985
        %v1017 = vadd.f32 %v978, %v985
        %v1018 = vadd.f32 %v979, %v985
        %v1019 = vmax.f32 %v987, 0.0
        %v1020 = vmax.f32 %v988, 0.0
        %v1021 = vmax.f32 %v989, 0.0
        %v1022 = vmax.f32 %v990, 0.0
        %v1023 = vmax.f32 %v991, 0.0
        %v1024 = vmax.f32 %v992, 0.0
        %v1025 = vmax.f32 %v993, 0.0
        %v1026 = vmax.f32 %v994, 0.0
        %v1027 = vmax.f32 %v995, 0.0
        %v1028 = vmax.f32 %v996, 0.0
        %v1029 = vmax.f32 %v997, 0.0
        %v1030 = vmax.f32 %v998, 0.0
        %v1031 = vmax.f32 %v999, 0.0
        %v1032 = vmax.f32 %v1000, 0.0
        %v1033 = vmax.f32 %v1001, 0.0
        %v1034 = vmax.f32 %v1002, 0.0
        %v1035 = vmax.f32 %v1003, 0.0
        %v1036 = vmax.f32 %v1004, 0.0
        %v1037 = vmax.f32 %v1005, 0.0
        %v1038 = vmax.f32 %v1006, 0.0
        %v1039 = vmax.f32 %v1007, 0.0
        %v1040 = vmax.f32 %v1008, 0.0
        %v1041 = vmax.f32 %v1009, 0.0
        %v1042 = vmax.f32 %v1010, 0.0
        %v1043 = vmax.f32 %v1011, 0.0
        %v1044 = vmax.f32 %v1012, 0.0
        %v1045 = vmax.f32 %v1013, 0.0
        %v1046 = vmax.f32 %v1014, 0.0
        %v1047 = vmax.f32 %v1015, 0.0
        %v1048 = vmax.f32 %v1016, 0.0
        %v1049 = vmax.f32 %v1017, 0.0
        %v1050 = vmax.f32 %v1018, 0.0
        %v1051 = vld [vmem:[%s6] sm:$0x1]
        %v1053 = vlaneseq
        %v1054 = vshrl.u32 %v1053, 7
        %v1055 = vsub.s32 0, %v1054
        %v1056 = vrot.slane %v1051, %v1055
        %v1058 = vmul.f32 %v1019, %v1056
        %v1059 = vmul.f32 %v1020, %v1056
        %v1060 = vmul.f32 %v1021, %v1056
        %v1061 = vmul.f32 %v1022, %v1056
        %v1062 = vmul.f32 %v1023, %v1056
        %v1063 = vmul.f32 %v1024, %v1056
        %v1064 = vmul.f32 %v1025, %v1056
        %v1065 = vmul.f32 %v1026, %v1056
        %v1066 = vmul.f32 %v1027, %v1056
        %v1067 = vmul.f32 %v1028, %v1056
        %v1068 = vmul.f32 %v1029, %v1056
        %v1069 = vmul.f32 %v1030, %v1056
        %v1070 = vmul.f32 %v1031, %v1056
        %v1071 = vmul.f32 %v1032, %v1056
        %v1072 = vmul.f32 %v1033, %v1056
        %v1073 = vmul.f32 %v1034, %v1056
        %v1074 = vmul.f32 %v1035, %v1056
        %v1075 = vmul.f32 %v1036, %v1056
        %v1076 = vmul.f32 %v1037, %v1056
        %v1077 = vmul.f32 %v1038, %v1056
        %v1078 = vmul.f32 %v1039, %v1056
        %v1079 = vmul.f32 %v1040, %v1056
        %v1080 = vmul.f32 %v1041, %v1056
        %v1081 = vmul.f32 %v1042, %v1056
        %v1082 = vmul.f32 %v1043, %v1056
        %v1083 = vmul.f32 %v1044, %v1056
        %v1084 = vmul.f32 %v1045, %v1056
        %v1085 = vmul.f32 %v1046, %v1056
        %v1086 = vmul.f32 %v1047, %v1056
        %v1087 = vmul.f32 %v1048, %v1056
        %v1088 = vmul.f32 %v1049, %v1056
        %v1089 = vmul.f32 %v1050, %v1056
        %vm1090 = vcmask 130048
        %v1091 = vsel %vm1090, %v1058, 0.0
        %1092 = vadd.xlane.f32.xlu0 %v1091
        %v1093 = vpop.xlane.xlu0 %1092
        %v1094 = vsel %vm1090, %v1059, 0.0
        %1095 = vadd.xlane.f32.xlu0 %v1094
        %v1096 = vpop.xlane.xlu0 %1095
        %v1097 = vsel %vm1090, %v1060, 0.0
        %1098 = vadd.xlane.f32.xlu0 %v1097
        %v1099 = vpop.xlane.xlu0 %1098
        %v1100 = vsel %vm1090, %v1061, 0.0
        %1101 = vadd.xlane.f32.xlu0 %v1100
        %v1102 = vpop.xlane.xlu0 %1101
        %v1103 = vsel %vm1090, %v1062, 0.0
        %1104 = vadd.xlane.f32.xlu0 %v1103
        %v1105 = vpop.xlane.xlu0 %1104
        %v1106 = vsel %vm1090, %v1063, 0.0
        %1107 = vadd.xlane.f32.xlu0 %v1106
        %v1108 = vpop.xlane.xlu0 %1107
        %v1109 = vsel %vm1090, %v1064, 0.0
        %1110 = vadd.xlane.f32.xlu0 %v1109
        %v1111 = vpop.xlane.xlu0 %1110
        %v1112 = vsel %vm1090, %v1065, 0.0
        %1113 = vadd.xlane.f32.xlu0 %v1112
        %v1114 = vpop.xlane.xlu0 %1113
        %v1115 = vsel %vm1090, %v1066, 0.0
        %1116 = vadd.xlane.f32.xlu0 %v1115
        %v1117 = vpop.xlane.xlu0 %1116
        %v1118 = vsel %vm1090, %v1067, 0.0
        %1119 = vadd.xlane.f32.xlu0 %v1118
        %v1120 = vpop.xlane.xlu0 %1119
        %v1121 = vsel %vm1090, %v1068, 0.0
        %1122 = vadd.xlane.f32.xlu0 %v1121
        %v1123 = vpop.xlane.xlu0 %1122
        %v1124 = vsel %vm1090, %v1069, 0.0
        %1125 = vadd.xlane.f32.xlu0 %v1124
        %v1126 = vpop.xlane.xlu0 %1125
        %v1127 = vsel %vm1090, %v1070, 0.0
        %1128 = vadd.xlane.f32.xlu0 %v1127
        %v1129 = vpop.xlane.xlu0 %1128
        %v1130 = vsel %vm1090, %v1071, 0.0
        %1131 = vadd.xlane.f32.xlu0 %v1130
        %v1132 = vpop.xlane.xlu0 %1131
        %v1133 = vsel %vm1090, %v1072, 0.0
        %1134 = vadd.xlane.f32.xlu0 %v1133
        %v1135 = vpop.xlane.xlu0 %1134
        %v1136 = vsel %vm1090, %v1073, 0.0
        %1137 = vadd.xlane.f32.xlu0 %v1136
        %v1138 = vpop.xlane.xlu0 %1137
        %v1139 = vsel %vm1090, %v1074, 0.0
        %1140 = vadd.xlane.f32.xlu0 %v1139
        %v1141 = vpop.xlane.xlu0 %1140
        %v1142 = vsel %vm1090, %v1075, 0.0
        %1143 = vadd.xlane.f32.xlu0 %v1142
        %v1144 = vpop.xlane.xlu0 %1143
        %v1145 = vsel %vm1090, %v1076, 0.0
        %1146 = vadd.xlane.f32.xlu0 %v1145
        %v1147 = vpop.xlane.xlu0 %1146
        %v1148 = vsel %vm1090, %v1077, 0.0
        %1149 = vadd.xlane.f32.xlu0 %v1148
        %v1150 = vpop.xlane.xlu0 %1149
        %v1151 = vsel %vm1090, %v1078, 0.0
        %1152 = vadd.xlane.f32.xlu0 %v1151
        %v1153 = vpop.xlane.xlu0 %1152
        %v1154 = vsel %vm1090, %v1079, 0.0
        %1155 = vadd.xlane.f32.xlu0 %v1154
        %v1156 = vpop.xlane.xlu0 %1155
        %v1157 = vsel %vm1090, %v1080, 0.0
        %1158 = vadd.xlane.f32.xlu0 %v1157
        %v1159 = vpop.xlane.xlu0 %1158
        %v1160 = vsel %vm1090, %v1081, 0.0
        %1161 = vadd.xlane.f32.xlu0 %v1160
        %v1162 = vpop.xlane.xlu0 %1161
        %v1163 = vsel %vm1090, %v1082, 0.0
        %1164 = vadd.xlane.f32.xlu0 %v1163
        %v1165 = vpop.xlane.xlu0 %1164
        %v1166 = vsel %vm1090, %v1083, 0.0
        %1167 = vadd.xlane.f32.xlu0 %v1166
        %v1168 = vpop.xlane.xlu0 %1167
        %v1169 = vsel %vm1090, %v1084, 0.0
        %1170 = vadd.xlane.f32.xlu0 %v1169
        %v1171 = vpop.xlane.xlu0 %1170
        %v1172 = vsel %vm1090, %v1085, 0.0
        %1173 = vadd.xlane.f32.xlu0 %v1172
        %v1174 = vpop.xlane.xlu0 %1173
        %v1175 = vsel %vm1090, %v1086, 0.0
        %1176 = vadd.xlane.f32.xlu0 %v1175
        %v1177 = vpop.xlane.xlu0 %1176
        %v1178 = vsel %vm1090, %v1087, 0.0
        %1179 = vadd.xlane.f32.xlu0 %v1178
        %v1180 = vpop.xlane.xlu0 %1179
        %v1181 = vsel %vm1090, %v1088, 0.0
        %1182 = vadd.xlane.f32.xlu0 %v1181
        %v1183 = vpop.xlane.xlu0 %1182
        %v1184 = vsel %vm1090, %v1089, 0.0
        %1185 = vadd.xlane.f32.xlu0 %v1184
        %v1186 = vpop.xlane.xlu0 %1185
        %v1187 = vld [vmem:[#allocation2] sm:$0x1]
        %v1189 = vlaneseq
        %v1190 = vshrl.u32 %v1189, 7
        %v1191 = vsub.s32 0, %v1190
        %v1192 = vrot.slane %v1187, %v1191
        %v1194 = vadd.f32 %v1093, %v1192
        %v1195 = vadd.f32 %v1096, %v1192
        %v1196 = vadd.f32 %v1099, %v1192
        %v1197 = vadd.f32 %v1102, %v1192
        %v1198 = vadd.f32 %v1105, %v1192
        %v1199 = vadd.f32 %v1108, %v1192
        %v1200 = vadd.f32 %v1111, %v1192
        %v1201 = vadd.f32 %v1114, %v1192
        %v1202 = vadd.f32 %v1117, %v1192
        %v1203 = vadd.f32 %v1120, %v1192
        %v1204 = vadd.f32 %v1123, %v1192
        %v1205 = vadd.f32 %v1126, %v1192
        %v1206 = vadd.f32 %v1129, %v1192
        %v1207 = vadd.f32 %v1132, %v1192
        %v1208 = vadd.f32 %v1135, %v1192
        %v1209 = vadd.f32 %v1138, %v1192
        %v1210 = vadd.f32 %v1141, %v1192
        %v1211 = vadd.f32 %v1144, %v1192
        %v1212 = vadd.f32 %v1147, %v1192
        %v1213 = vadd.f32 %v1150, %v1192
        %v1214 = vadd.f32 %v1153, %v1192
        %v1215 = vadd.f32 %v1156, %v1192
        %v1216 = vadd.f32 %v1159, %v1192
        %v1217 = vadd.f32 %v1162, %v1192
        %v1218 = vadd.f32 %v1165, %v1192
        %v1219 = vadd.f32 %v1168, %v1192
        %v1220 = vadd.f32 %v1171, %v1192
        %v1221 = vadd.f32 %v1174, %v1192
        %v1222 = vadd.f32 %v1177, %v1192
        %v1223 = vadd.f32 %v1180, %v1192
        %v1224 = vadd.f32 %v1183, %v1192
        %v1225 = vadd.f32 %v1186, %v1192
        %v1226 = vsub.f32 0.0, %v1194
        %v1227 = vsub.f32 0.0, %v1195
        %v1228 = vsub.f32 0.0, %v1196
        %v1229 = vsub.f32 0.0, %v1197
        %v1230 = vsub.f32 0.0, %v1198
        %v1231 = vsub.f32 0.0, %v1199
        %v1232 = vsub.f32 0.0, %v1200
        %v1233 = vsub.f32 0.0, %v1201
        %v1234 = vsub.f32 0.0, %v1202
        %v1235 = vsub.f32 0.0, %v1203
        %v1236 = vsub.f32 0.0, %v1204
        %v1237 = vsub.f32 0.0, %v1205
        %v1238 = vsub.f32 0.0, %v1206
        %v1239 = vsub.f32 0.0, %v1207
        %v1240 = vsub.f32 0.0, %v1208
        %v1241 = vsub.f32 0.0, %v1209
        %v1242 = vsub.f32 0.0, %v1210
        %v1243 = vsub.f32 0.0, %v1211
        %v1244 = vsub.f32 0.0, %v1212
        %v1245 = vsub.f32 0.0, %v1213
        %v1246 = vsub.f32 0.0, %v1214
        %v1247 = vsub.f32 0.0, %v1215
        %v1248 = vsub.f32 0.0, %v1216
        %v1249 = vsub.f32 0.0, %v1217
        %v1250 = vsub.f32 0.0, %v1218
        %v1251 = vsub.f32 0.0, %v1219
        %v1252 = vsub.f32 0.0, %v1220
        %v1253 = vsub.f32 0.0, %v1221
        %v1254 = vsub.f32 0.0, %v1222
        %v1255 = vsub.f32 0.0, %v1223
        %v1256 = vsub.f32 0.0, %v1224
        %v1257 = vsub.f32 0.0, %v1225
        %v1258 = vmul.f32 %v1226, 1.442695
        %v1259 = vpow.pop %v1258
        %v1260 = vmul.f32 %v1227, 1.442695
        %v1261 = vpow.pop %v1260
        %v1262 = vmul.f32 %v1228, 1.442695
        %v1263 = vpow.pop %v1262
        %v1264 = vmul.f32 %v1229, 1.442695
        %v1265 = vpow.pop %v1264
        %v1266 = vmul.f32 %v1230, 1.442695
        %v1267 = vpow.pop %v1266
        %v1268 = vmul.f32 %v1231, 1.442695
        %v1269 = vpow.pop %v1268
        %v1270 = vmul.f32 %v1232, 1.442695
        %v1271 = vpow.pop %v1270
        %v1272 = vmul.f32 %v1233, 1.442695
        %v1273 = vpow.pop %v1272
        %v1274 = vmul.f32 %v1234, 1.442695
        %v1275 = vpow.pop %v1274
        %v1276 = vmul.f32 %v1235, 1.442695
        %v1277 = vpow.pop %v1276
        %v1278 = vmul.f32 %v1236, 1.442695
        %v1279 = vpow.pop %v1278
        %v1280 = vmul.f32 %v1237, 1.442695
        %v1281 = vpow.pop %v1280
        %v1282 = vmul.f32 %v1238, 1.442695
        %v1283 = vpow.pop %v1282
        %v1284 = vmul.f32 %v1239, 1.442695
        %v1285 = vpow.pop %v1284
        %v1286 = vmul.f32 %v1240, 1.442695
        %v1287 = vpow.pop %v1286
        %v1288 = vmul.f32 %v1241, 1.442695
        %v1289 = vpow.pop %v1288
        %v1290 = vmul.f32 %v1242, 1.442695
        %v1291 = vpow.pop %v1290
        %v1292 = vmul.f32 %v1243, 1.442695
        %v1293 = vpow.pop %v1292
        %v1294 = vmul.f32 %v1244, 1.442695
        %v1295 = vpow.pop %v1294
        %v1296 = vmul.f32 %v1245, 1.442695
        %v1297 = vpow.pop %v1296
        %v1298 = vmul.f32 %v1246, 1.442695
        %v1299 = vpow.pop %v1298
        %v1300 = vmul.f32 %v1247, 1.442695
        %v1301 = vpow.pop %v1300
        %v1302 = vmul.f32 %v1248, 1.442695
        %v1303 = vpow.pop %v1302
        %v1304 = vmul.f32 %v1249, 1.442695
        %v1305 = vpow.pop %v1304
        %v1306 = vmul.f32 %v1250, 1.442695
        %v1307 = vpow.pop %v1306
        %v1308 = vmul.f32 %v1251, 1.442695
        %v1309 = vpow.pop %v1308
        %v1310 = vmul.f32 %v1252, 1.442695
        %v1311 = vpow.pop %v1310
        %v1312 = vmul.f32 %v1253, 1.442695
        %v1313 = vpow.pop %v1312
        %v1314 = vmul.f32 %v1254, 1.442695
        %v1315 = vpow.pop %v1314
        %v1316 = vmul.f32 %v1255, 1.442695
        %v1317 = vpow.pop %v1316
        %v1318 = vmul.f32 %v1256, 1.442695
        %v1319 = vpow.pop %v1318
        %v1320 = vmul.f32 %v1257, 1.442695
        %v1321 = vpow.pop %v1320
        %v1322 = vadd.f32 %v1259, 1.0
        %v1323 = vadd.f32 %v1261, 1.0
        %v1324 = vadd.f32 %v1263, 1.0
        %v1325 = vadd.f32 %v1265, 1.0
        %v1326 = vadd.f32 %v1267, 1.0
        %v1327 = vadd.f32 %v1269, 1.0
        %v1328 = vadd.f32 %v1271, 1.0
        %v1329 = vadd.f32 %v1273, 1.0
        %v1330 = vadd.f32 %v1275, 1.0
        %v1331 = vadd.f32 %v1277, 1.0
        %v1332 = vadd.f32 %v1279, 1.0
        %v1333 = vadd.f32 %v1281, 1.0
        %v1334 = vadd.f32 %v1283, 1.0
        %v1335 = vadd.f32 %v1285, 1.0
        %v1336 = vadd.f32 %v1287, 1.0
        %v1337 = vadd.f32 %v1289, 1.0
        %v1338 = vadd.f32 %v1291, 1.0
        %v1339 = vadd.f32 %v1293, 1.0
        %v1340 = vadd.f32 %v1295, 1.0
        %v1341 = vadd.f32 %v1297, 1.0
        %v1342 = vadd.f32 %v1299, 1.0
        %v1343 = vadd.f32 %v1301, 1.0
        %v1344 = vadd.f32 %v1303, 1.0
        %v1345 = vadd.f32 %v1305, 1.0
        %v1346 = vadd.f32 %v1307, 1.0
        %v1347 = vadd.f32 %v1309, 1.0
        %v1348 = vadd.f32 %v1311, 1.0
        %v1349 = vadd.f32 %v1313, 1.0
        %v1350 = vadd.f32 %v1315, 1.0
        %v1351 = vadd.f32 %v1317, 1.0
        %v1352 = vadd.f32 %v1319, 1.0
        %v1353 = vadd.f32 %v1321, 1.0
        %v1354 = vrcp.pop %v1322
        %v1355 = vmul.f32 1.0, %v1354
        %v1356 = vrcp.pop %v1323
        %v1357 = vmul.f32 1.0, %v1356
        %v1358 = vrcp.pop %v1324
        %v1359 = vmul.f32 1.0, %v1358
        %v1360 = vrcp.pop %v1325
        %v1361 = vmul.f32 1.0, %v1360
        %v1362 = vrcp.pop %v1326
        %v1363 = vmul.f32 1.0, %v1362
        %v1364 = vrcp.pop %v1327
        %v1365 = vmul.f32 1.0, %v1364
        %v1366 = vrcp.pop %v1328
        %v1367 = vmul.f32 1.0, %v1366
        %v1368 = vrcp.pop %v1329
        %v1369 = vmul.f32 1.0, %v1368
        %v1370 = vrcp.pop %v1330
        %v1371 = vmul.f32 1.0, %v1370
        %v1372 = vrcp.pop %v1331
        %v1373 = vmul.f32 1.0, %v1372
        %v1374 = vrcp.pop %v1332
        %v1375 = vmul.f32 1.0, %v1374
        %v1376 = vrcp.pop %v1333
        %v1377 = vmul.f32 1.0, %v1376
        %v1378 = vrcp.pop %v1334
        %v1379 = vmul.f32 1.0, %v1378
        %v1380 = vrcp.pop %v1335
        %v1381 = vmul.f32 1.0, %v1380
        %v1382 = vrcp.pop %v1336
        %v1383 = vmul.f32 1.0, %v1382
        %v1384 = vrcp.pop %v1337
        %v1385 = vmul.f32 1.0, %v1384
        %v1386 = vrcp.pop %v1338
        %v1387 = vmul.f32 1.0, %v1386
        %v1388 = vrcp.pop %v1339
        %v1389 = vmul.f32 1.0, %v1388
        %v1390 = vrcp.pop %v1340
        %v1391 = vmul.f32 1.0, %v1390
        %v1392 = vrcp.pop %v1341
        %v1393 = vmul.f32 1.0, %v1392
        %v1394 = vrcp.pop %v1342
        %v1395 = vmul.f32 1.0, %v1394
        %v1396 = vrcp.pop %v1343
        %v1397 = vmul.f32 1.0, %v1396
        %v1398 = vrcp.pop %v1344
        %v1399 = vmul.f32 1.0, %v1398
        %v1400 = vrcp.pop %v1345
        %v1401 = vmul.f32 1.0, %v1400
        %v1402 = vrcp.pop %v1346
        %v1403 = vmul.f32 1.0, %v1402
        %v1404 = vrcp.pop %v1347
        %v1405 = vmul.f32 1.0, %v1404
        %v1406 = vrcp.pop %v1348
        %v1407 = vmul.f32 1.0, %v1406
        %v1408 = vrcp.pop %v1349
        %v1409 = vmul.f32 1.0, %v1408
        %v1410 = vrcp.pop %v1350
        %v1411 = vmul.f32 1.0, %v1410
        %v1412 = vrcp.pop %v1351
        %v1413 = vmul.f32 1.0, %v1412
        %v1414 = vrcp.pop %v1352
        %v1415 = vmul.f32 1.0, %v1414
        %v1416 = vrcp.pop %v1353
        %v1417 = vmul.f32 1.0, %v1416
        %1419 = vset.pattern.permute.xlu0 0
        %1420 = vperm.xlu0 %1419, %v1355
        %v1421 = vpop.permute.xlu0 %1420
        %1424 = vset.pattern.permute.xlu0 0
        %1425 = vperm.xlu0 %1424, %v1357
        %v1426 = vpop.permute.xlu0 %1425
        %1429 = vset.pattern.permute.xlu0 0
        %1430 = vperm.xlu0 %1429, %v1359
        %v1431 = vpop.permute.xlu0 %1430
        %1434 = vset.pattern.permute.xlu0 0
        %1435 = vperm.xlu0 %1434, %v1361
        %v1436 = vpop.permute.xlu0 %1435
        %1439 = vset.pattern.permute.xlu0 0
        %1440 = vperm.xlu0 %1439, %v1363
        %v1441 = vpop.permute.xlu0 %1440
        %1444 = vset.pattern.permute.xlu0 0
        %1445 = vperm.xlu0 %1444, %v1365
        %v1446 = vpop.permute.xlu0 %1445
        %1449 = vset.pattern.permute.xlu0 0
        %1450 = vperm.xlu0 %1449, %v1367
        %v1451 = vpop.permute.xlu0 %1450
        %1454 = vset.pattern.permute.xlu0 0
        %1455 = vperm.xlu0 %1454, %v1369
        %v1456 = vpop.permute.xlu0 %1455
        %1459 = vset.pattern.permute.xlu0 0
        %1460 = vperm.xlu0 %1459, %v1371
        %v1461 = vpop.permute.xlu0 %1460
        %1464 = vset.pattern.permute.xlu0 0
        %1465 = vperm.xlu0 %1464, %v1373
        %v1466 = vpop.permute.xlu0 %1465
        %1469 = vset.pattern.permute.xlu0 0
        %1470 = vperm.xlu0 %1469, %v1375
        %v1471 = vpop.permute.xlu0 %1470
        %1474 = vset.pattern.permute.xlu0 0
        %1475 = vperm.xlu0 %1474, %v1377
        %v1476 = vpop.permute.xlu0 %1475
        %1479 = vset.pattern.permute.xlu0 0
        %1480 = vperm.xlu0 %1479, %v1379
        %v1481 = vpop.permute.xlu0 %1480
        %1484 = vset.pattern.permute.xlu0 0
        %1485 = vperm.xlu0 %1484, %v1381
        %v1486 = vpop.permute.xlu0 %1485
        %1489 = vset.pattern.permute.xlu0 0
        %1490 = vperm.xlu0 %1489, %v1383
        %v1491 = vpop.permute.xlu0 %1490
        %1494 = vset.pattern.permute.xlu0 0
        %1495 = vperm.xlu0 %1494, %v1385
        %v1496 = vpop.permute.xlu0 %1495
        %1499 = vset.pattern.permute.xlu0 0
        %1500 = vperm.xlu0 %1499, %v1387
        %v1501 = vpop.permute.xlu0 %1500
        %1504 = vset.pattern.permute.xlu0 0
        %1505 = vperm.xlu0 %1504, %v1389
        %v1506 = vpop.permute.xlu0 %1505
        %1509 = vset.pattern.permute.xlu0 0
        %1510 = vperm.xlu0 %1509, %v1391
        %v1511 = vpop.permute.xlu0 %1510
        %1514 = vset.pattern.permute.xlu0 0
        %1515 = vperm.xlu0 %1514, %v1393
        %v1516 = vpop.permute.xlu0 %1515
        %1519 = vset.pattern.permute.xlu0 0
        %1520 = vperm.xlu0 %1519, %v1395
        %v1521 = vpop.permute.xlu0 %1520
        %1524 = vset.pattern.permute.xlu0 0
        %1525 = vperm.xlu0 %1524, %v1397
        %v1526 = vpop.permute.xlu0 %1525
        %1529 = vset.pattern.permute.xlu0 0
        %1530 = vperm.xlu0 %1529, %v1399
        %v1531 = vpop.permute.xlu0 %1530
        %1534 = vset.pattern.permute.xlu0 0
        %1535 = vperm.xlu0 %1534, %v1401
        %v1536 = vpop.permute.xlu0 %1535
        %1539 = vset.pattern.permute.xlu0 0
        %1540 = vperm.xlu0 %1539, %v1403
        %v1541 = vpop.permute.xlu0 %1540
        %1544 = vset.pattern.permute.xlu0 0
        %1545 = vperm.xlu0 %1544, %v1405
        %v1546 = vpop.permute.xlu0 %1545
        %1549 = vset.pattern.permute.xlu0 0
        %1550 = vperm.xlu0 %1549, %v1407
        %v1551 = vpop.permute.xlu0 %1550
        %1554 = vset.pattern.permute.xlu0 0
        %1555 = vperm.xlu0 %1554, %v1409
        %v1556 = vpop.permute.xlu0 %1555
        %1559 = vset.pattern.permute.xlu0 0
        %1560 = vperm.xlu0 %1559, %v1411
        %v1561 = vpop.permute.xlu0 %1560
        %1564 = vset.pattern.permute.xlu0 0
        %1565 = vperm.xlu0 %1564, %v1413
        %v1566 = vpop.permute.xlu0 %1565
        %1569 = vset.pattern.permute.xlu0 0
        %1570 = vperm.xlu0 %1569, %v1415
        %v1571 = vpop.permute.xlu0 %1570
        %1574 = vset.pattern.permute.xlu0 0
        %1575 = vperm.xlu0 %1574, %v1417
        %v1576 = vpop.permute.xlu0 %1575
        %v1578 = vmul.f32 %v426, %v1421
        %v1579 = vmul.f32 %v427, %v1426
        %v1580 = vmul.f32 %v428, %v1431
        %v1581 = vmul.f32 %v429, %v1436
        %v1582 = vmul.f32 %v430, %v1441
        %v1583 = vmul.f32 %v431, %v1446
        %v1584 = vmul.f32 %v432, %v1451
        %v1585 = vmul.f32 %v433, %v1456
        %v1586 = vmul.f32 %v434, %v1461
        %v1587 = vmul.f32 %v435, %v1466
        %v1588 = vmul.f32 %v436, %v1471
        %v1589 = vmul.f32 %v437, %v1476
        %v1590 = vmul.f32 %v438, %v1481
        %v1591 = vmul.f32 %v439, %v1486
        %v1592 = vmul.f32 %v440, %v1491
        %v1593 = vmul.f32 %v441, %v1496
        %v1594 = vmul.f32 %v442, %v1501
        %v1595 = vmul.f32 %v443, %v1506
        %v1596 = vmul.f32 %v444, %v1511
        %v1597 = vmul.f32 %v445, %v1516
        %v1598 = vmul.f32 %v446, %v1521
        %v1599 = vmul.f32 %v447, %v1526
        %v1600 = vmul.f32 %v448, %v1531
        %v1601 = vmul.f32 %v449, %v1536
        %v1602 = vmul.f32 %v450, %v1541
        %v1603 = vmul.f32 %v451, %v1546
        %v1604 = vmul.f32 %v452, %v1551
        %v1605 = vmul.f32 %v453, %v1556
        %v1606 = vmul.f32 %v454, %v1561
        %v1607 = vmul.f32 %v455, %v1566
        %v1608 = vmul.f32 %v456, %v1571
        %v1609 = vmul.f32 %v457, %v1576
        %1610 = vst.msk [vmem:[%s389] sm:$0xff] %vm497, %v1578
        %1611 = vst.msk [vmem:[%s389 + $0x8] sm:$0xff] %vm497, %v1579
        %1612 = vst.msk [vmem:[%s389 + $0x10] sm:$0xff] %vm497, %v1580
        %1613 = vst.msk [vmem:[%s389 + $0x18] sm:$0xff] %vm497, %v1581
        %1614 = vst.msk [vmem:[%s389 + $0x20] sm:$0xff] %vm497, %v1582
        %1615 = vst.msk [vmem:[%s389 + $0x28] sm:$0xff] %vm497, %v1583
        %1616 = vst.msk [vmem:[%s389 + $0x30] sm:$0xff] %vm497, %v1584
        %1617 = vst.msk [vmem:[%s389 + $0x38] sm:$0xff] %vm497, %v1585
        %1618 = vst.msk [vmem:[%s389 + $0x40] sm:$0xff] %vm497, %v1586
        %1619 = vst.msk [vmem:[%s389 + $0x48] sm:$0xff] %vm497, %v1587
        %1620 = vst.msk [vmem:[%s389 + $0x50] sm:$0xff] %vm497, %v1588
        %1621 = vst.msk [vmem:[%s389 + $0x58] sm:$0xff] %vm497, %v1589
        %1622 = vst.msk [vmem:[%s389 + $0x60] sm:$0xff] %vm497, %v1590
        %1623 = vst.msk [vmem:[%s389 + $0x68] sm:$0xff] %vm497, %v1591
        %1624 = vst.msk [vmem:[%s389 + $0x70] sm:$0xff] %vm497, %v1592
        %1625 = vst.msk [vmem:[%s389 + $0x78] sm:$0xff] %vm497, %v1593
        %1626 = vst.msk [vmem:[%s389 + $0x80] sm:$0xff] %vm497, %v1594
        %1627 = vst.msk [vmem:[%s389 + $0x88] sm:$0xff] %vm497, %v1595
        %1628 = vst.msk [vmem:[%s389 + $0x90] sm:$0xff] %vm497, %v1596
        %1629 = vst.msk [vmem:[%s389 + $0x98] sm:$0xff] %vm497, %v1597
        %1630 = vst.msk [vmem:[%s389 + $0xa0] sm:$0xff] %vm497, %v1598
        %1631 = vst.msk [vmem:[%s389 + $0xa8] sm:$0xff] %vm497, %v1599
        %1632 = vst.msk [vmem:[%s389 + $0xb0] sm:$0xff] %vm497, %v1600
        %1633 = vst.msk [vmem:[%s389 + $0xb8] sm:$0xff] %vm497, %v1601
        %1634 = vst.msk [vmem:[%s389 + $0xc0] sm:$0xff] %vm497, %v1602
        %1635 = vst.msk [vmem:[%s389 + $0xc8] sm:$0xff] %vm497, %v1603
        %1636 = vst.msk [vmem:[%s389 + $0xd0] sm:$0xff] %vm497, %v1604
        %1637 = vst.msk [vmem:[%s389 + $0xd8] sm:$0xff] %vm497, %v1605
        %1638 = vst.msk [vmem:[%s389 + $0xe0] sm:$0xff] %vm497, %v1606
        %1639 = vst.msk [vmem:[%s389 + $0xe8] sm:$0xff] %vm497, %v1607
        %1640 = vst.msk [vmem:[%s389 + $0xf0] sm:$0xff] %vm497, %v1608
        %1641 = vst.msk [vmem:[%s389 + $0xf8] sm:$0xff] %vm497, %v1609
        %s1642 = sand.u32 %s234, 1
        %s1643 = scalar_lea.sflag [#allocation5], %s1642
        %s1644 = sand.u32 %s234, 1
        %s1645 = smul.addr %s1644, 256
        %s1646 = scalar_lea.vmem [#allocation8], %s1645
        // Predicated region
        $region61: #{attention_block_forward.1} parent=51 // pred_check
          %p1647 = pneg %p244
        $region62: #{attention_block_forward.1} parent=51 // pred_check_branch
          %1649 = sbr.rel (%p1647) target = $region64
        $region63: #{attention_block_forward.1} parent=51 // pred_region
          %s1650 = smul.u32 16, %s35
          %s1652 = ssub.s32 4096, 4096
          %1653 = vsyncadd %s1643, %s1652
          %s1654 = smul.addr %s1650, 2
          %s1655 = smul.addr %s34, 32
          %s1656 = sadd.s32 %s1654, %s1655
          %s1657 = smul.addr %s1656, 128
          %s1658 = scalar_lea.hbm %s8, %s1657
          %s1659 = sshll.u32 %s1646, 4
          %s1660 = int_to_ptr.vmem [resolvable:$true] %s1659
          %1665 = dma.vmem_to_hbm [thread:$0]  %s1660, 4096, %s1658, %s1643, 128, 128, 8
        $region64: #{attention_block_forward.1} parent=51 // pred_fallthru
          _
      $region52: #{attention_block_forward.1} parent=5 // pred_fallthru
        _
      %p1666 = scmp.le.s32.totalorder 2, %s25
      // Predicated region
      $region65: #{attention_block_forward.1} parent=5 // pred_check
        %p1667 = pneg %p1666
      $region66: #{attention_block_forward.1} parent=5 // pred_check_branch
        %1669 = sbr.rel (%p1667) target = $region68
      $region67: #{attention_block_forward.1} parent=5 // pred_region
        %s1670 = ssub.s32 %s25, 2
        // Predicated region
        $region69: #{attention_block_forward.1} parent=67 // pred_check
          %p1671 = pneg %p250
        $region70: #{attention_block_forward.1} parent=67 // pred_check_branch
          %1673 = sbr.rel (%p1671) target = $region72
        $region71: #{attention_block_forward.1} parent=67 // pred_region
          %s1674 = sand.u32 %s235, 1
          %s1675 = scalar_lea.sflag [#allocation5], %s1674
          %s1676 = sand.u32 %s235, 1
          %s1677 = smul.addr %s1676, 256
          %s1678 = scalar_lea.vmem [#allocation8], %s1677
          %1679 = dma.done %s1675, 4096
        $region72: #{attention_block_forward.1} parent=67 // pred_fallthru
          _
      $region68: #{attention_block_forward.1} parent=5 // pred_fallthru
        _
    $region6: #{attention_block_forward.1} parent=1 // loop_footer
      %s29 = sadd.s32 1, %s25
    $region7: #{attention_block_forward.1} parent=1 // loop_footer_branch
      %24 = sbr.rel target = $region3
    $region8: #{attention_block_forward.1} parent=1 // loop_exit
      _
    %1680 = vsyncpa [#allocation4], 1
    %s1681 = scalar_lea.sflag [#allocation4], 1
    %1682 = vsyncpa %s1681, 1
    %1683 = vsyncpa [#allocation7], 1
    %s1684 = scalar_lea.sflag [#allocation7], 1
    %1685 = vsyncpa %s1684, 1
    %1686 = vsyncpa [#allocation5], 1
    %s1687 = scalar_lea.sflag [#allocation5], 1
    %1688 = vsyncpa %s1687, 1

</llo_original>
